<compile_context>
chip_gen: v6e
topology: v6e:2x2x1
jax: 0.10.0
libtpu: 0.0.40
codegen_flags: <defaults>
</compile_context>

<pallas_src>
import math
import functools

import jax
import jax.numpy as jnp
from jax import lax
from jax.experimental import pallas as pl
from jax.experimental.pallas import tpu as pltpu


# ---------------------------------------------------------------------------
# Fused kernel: embedding+PE (layer 0 only) + one TransformerEncoderLayer
# per grid step along the layer axis.  Activations are carried in the resident
# output block (same block index across the layer axis).
# ---------------------------------------------------------------------------
def _text_encoder_kernel(ids_ref,                        # SMEM [B, S] int32 (prefetch)
                         table_ref, pe_ref,              # [V,E], [S,E]   (resident)
                         w_in_ref, b_in_ref,             # [1,E,3E], [1,1,3E]
                         w_out_ref, b_out_ref,           # [1,E,E],  [1,1,E]
                         ln1_g_ref, ln1_b_ref,           # [1,1,E]
                         w1_ref, b1_ref,                 # [1,E,Hff],[1,1,Hff]
                         w2_ref, b2_ref,                 # [1,Hff,E],[1,1,E]
                         ln2_g_ref, ln2_b_ref,           # [1,1,E]
                         out_ref,                        # [1,S,E]  (carry + output)
                         ctx_ref,                        # VMEM (S,E) f32 scratch
                         *, num_heads, head_dim, seq_len, eps):
    b = pl.program_id(0)
    layer = pl.program_id(1)
    E = num_heads * head_dim

    # ---- layer 0 only: token embedding gather + positional encoding ----
    @pl.when(layer == 0)
    def _():
        for s in range(seq_len):                         # static unroll
            tok = ids_ref[b, s]                          # scalar id from SMEM
            out_ref[0, pl.ds(s, 1), :] = (table_ref[pl.ds(tok, 1), :]
                                          + pe_ref[pl.ds(s, 1), :])

    x = out_ref[0]                                       # (S, E) carried activation

    # ---- fused Q/K/V projection: one (S,E)@(E,3E) MXU matmul ----
    qkv = jnp.dot(x, w_in_ref[0],
                  preferred_element_type=jnp.float32) + b_in_ref[0]
    q = qkv[:, 0 * E:1 * E]
    k = qkv[:, 1 * E:2 * E]
    v = qkv[:, 2 * E:3 * E]

    scale = 1.0 / math.sqrt(head_dim)                    # python constant

    # ---- per-head attention; head context written into columns of ctx ----
    for h in range(num_heads):                           # static unroll
        lo = h * head_dim
        qh = q[:, lo:lo + head_dim] * scale              # (S, Dh)
        kh = k[:, lo:lo + head_dim]
        vh = v[:, lo:lo + head_dim]
        s = jnp.einsum('qd,kd->qk', qh, kh,
                       preferred_element_type=jnp.float32)   # (S, S)
        m = jnp.max(s, axis=-1, keepdims=True)
        e = jnp.exp(s - m)
        denom = jnp.sum(e, axis=-1, keepdims=True)
        # deferred softmax normalization: (e @ V) * 1/denom
        oh = (jnp.dot(e, vh, preferred_element_type=jnp.float32)
              * pl.reciprocal(denom, approx=False))
        ctx_ref[:, lo:lo + head_dim] = oh

    # ---- out-projection + residual ----
    attn = jnp.dot(ctx_ref[...], w_out_ref[0],
                   preferred_element_type=jnp.float32) + b_out_ref[0]
    # TODO(synk): dropout (p=0.1 in the PyTorch layer) is identity here
    # (eval-mode forward).
    y = x + attn

    # ---- LayerNorm 1 ----
    mu = jnp.mean(y, axis=-1, keepdims=True)
    var = jnp.mean((y - mu) ** 2, axis=-1, keepdims=True)
    y = (y - mu) * lax.rsqrt(var + eps) * ln1_g_ref[0] + ln1_b_ref[0]

    # ---- feed-forward: (S,E)@(E,Hff) -> ReLU -> (S,Hff)@(Hff,E) ----
    hmid = jnp.dot(y, w1_ref[0], preferred_element_type=jnp.float32) + b1_ref[0]
    hmid = jnp.maximum(hmid, 0.0)
    ff = jnp.dot(hmid, w2_ref[0], preferred_element_type=jnp.float32) + b2_ref[0]
    z = y + ff

    # ---- LayerNorm 2 -> write back into the carried output block ----
    mu2 = jnp.mean(z, axis=-1, keepdims=True)
    var2 = jnp.mean((z - mu2) ** 2, axis=-1, keepdims=True)
    out_ref[0] = ((z - mu2) * lax.rsqrt(var2 + eps)
                  * ln2_g_ref[0] + ln2_b_ref[0]).astype(out_ref.dtype)


def text_encoder_forward(input_ids, params, num_heads, eps=1e-5):
    """Full TextEncoder forward (eval mode, no mask) -> [B, S, E] float32."""
    # TODO(synk): the optional attention_mask arg of the PyTorch module is not
    # wired in — the module itself calls the encoder with src_key_padding_mask=None.
    B, S = input_ids.shape
    V, E = params['embedding'].shape
    layers = params['layers']
    L = len(layers)
    Hff = layers[0]['w1'].shape[0]
    Dh = E // num_heads
    assert Dh * num_heads == E

    # Stack per-layer weights along a leading layer axis (nn.Linear (out,in)
    # convention -> transpose so the kernel does x @ W).
    stackT = lambda key: jnp.stack([lp[key].T for lp in layers], axis=0)
    stack1 = lambda key: jnp.stack([lp[key].reshape(1, -1) for lp in layers], axis=0)

    w_in = stackT('w_in')        # (L, E, 3E)
    b_in = stack1('b_in')        # (L, 1, 3E)
    w_out = stackT('w_out')      # (L, E, E)
    b_out = stack1('b_out')      # (L, 1, E)
    ln1_g = stack1('ln1_g')
    ln1_b = stack1('ln1_b')
    w1 = stackT('w1')            # (L, E, Hff)
    b1 = stack1('b1')            # (L, 1, Hff)
    w2 = stackT('w2')            # (L, Hff, E)
    b2 = stack1('b2')            # (L, 1, E)
    ln2_g = stack1('ln2_g')
    ln2_b = stack1('ln2_b')

    pe = params['pe'][:S]        # (S, E)

    kernel = functools.partial(_text_encoder_kernel,
                               num_heads=num_heads, head_dim=Dh,
                               seq_len=S, eps=eps)

    const2 = lambda b, l, ids: (0, 0)        # resident (table / PE)
    perlayer = lambda b, l, ids: (l, 0, 0)   # one layer's weights per step

    grid_spec = pltpu.PrefetchScalarGridSpec(
        num_scalar_prefetch=1,               # token ids in SMEM
        grid=(B, L),                         # layer axis LAST -> activation carry
        in_specs=[
            pl.BlockSpec((V, E), const2),             # embedding table
            pl.BlockSpec((S, E), const2),             # positional encoding
            pl.BlockSpec((1, E, 3 * E), perlayer),    # W_in^T
            pl.BlockSpec((1, 1, 3 * E), perlayer),    # b_in
            pl.BlockSpec((1, E, E), perlayer),        # W_out^T
            pl.BlockSpec((1, 1, E), perlayer),        # b_out
            pl.BlockSpec((1, 1, E), perlayer),        # ln1 gamma
            pl.BlockSpec((1, 1, E), perlayer),        # ln1 beta
            pl.BlockSpec((1, E, Hff), perlayer),      # W1^T
            pl.BlockSpec((1, 1, Hff), perlayer),      # b1
            pl.BlockSpec((1, Hff, E), perlayer),      # W2^T
            pl.BlockSpec((1, 1, E), perlayer),        # b2
            pl.BlockSpec((1, 1, E), perlayer),        # ln2 gamma
            pl.BlockSpec((1, 1, E), perlayer),        # ln2 beta
        ],
        out_specs=pl.BlockSpec((1, S, E), lambda b, l, ids: (b, 0, 0)),
        scratch_shapes=[pltpu.VMEM((S, E), jnp.float32)],   # head-concat ctx
    )
    return pl.pallas_call(
        kernel,
        grid_spec=grid_spec,
        out_shape=jax.ShapeDtypeStruct((B, S, E), jnp.float32),
        compiler_params=pltpu.CompilerParams(
            dimension_semantics=("parallel", "arbitrary")),
    )(input_ids.astype(jnp.int32), params['embedding'], pe,
      w_in, b_in, w_out, b_out, ln1_g, ln1_b,
      w1, b1, w2, b2, ln2_g, ln2_b)


# ---------------------------------------------------------------------------
# Pure-JAX reference (matches PyTorch eval-mode semantics)
# ---------------------------------------------------------------------------
def _layer_norm_ref(x, g, b, eps=1e-5):
    mu = jnp.mean(x, axis=-1, keepdims=True)
    var = jnp.mean((x - mu) ** 2, axis=-1, keepdims=True)
    return (x - mu) * jax.lax.rsqrt(var + eps) * g + b


def _reference_layer(x, lp, num_heads, eps=1e-5):
    B, S, E = x.shape
    Dh = E // num_heads
    qkv = x @ lp['w_in'].T + lp['b_in']
    q, k, v = qkv[..., :E], qkv[..., E:2 * E], qkv[..., 2 * E:]
    q = q.reshape(B, S, num_heads, Dh).transpose(0, 2, 1, 3)
    k = k.reshape(B, S, num_heads, Dh).transpose(0, 2, 1, 3)
    v = v.reshape(B, S, num_heads, Dh).transpose(0, 2, 1, 3)
    s = jnp.einsum('bhqd,bhkd->bhqk', q, k) / math.sqrt(Dh)
    a = jax.nn.softmax(s, axis=-1)
    o = jnp.einsum('bhqk,bhkd->bhqd', a, v).transpose(0, 2, 1, 3).reshape(B, S, E)
    o = o @ lp['w_out'].T + lp['b_out']
    y = _layer_norm_ref(x + o, lp['ln1_g'], lp['ln1_b'], eps)
    ff = jnp.maximum(y @ lp['w1'].T + lp['b1'], 0.0) @ lp['w2'].T + lp['b2']
    return _layer_norm_ref(y + ff, lp['ln2_g'], lp['ln2_b'], eps)


def _reference(input_ids, params, num_heads):
    S = input_ids.shape[1]
    x = params['embedding'][input_ids] + params['pe'][:S]
    for lp in params['layers']:
        x = _reference_layer(x, lp, num_heads)
    return x


# ---------------------------------------------------------------------------
# Parameter construction
# ---------------------------------------------------------------------------
def _positional_encoding(max_len, embed_dim):
    position = jnp.arange(max_len, dtype=jnp.float32)[:, None]
    div_term = jnp.exp(jnp.arange(0, embed_dim, 2, dtype=jnp.float32)
                       * (-math.log(10000.0) / embed_dim))
    pe = jnp.zeros((max_len, embed_dim), jnp.float32)
    pe = pe.at[:, 0::2].set(jnp.sin(position * div_term))
    pe = pe.at[:, 1::2].set(jnp.cos(position * div_term))
    return pe


def _init_layer_params(key, embed_dim, hidden_dim):
    ks = jax.random.split(key, 8)

    def u(k, shape, fan_in):
        bound = 1.0 / math.sqrt(fan_in)
        return jax.random.uniform(k, shape, jnp.float32, -bound, bound)

    return {
        'w_in': u(ks[0], (3 * embed_dim, embed_dim), embed_dim),
        'b_in': u(ks[1], (3 * embed_dim,), embed_dim),
        'w_out': u(ks[2], (embed_dim, embed_dim), embed_dim),
        'b_out': u(ks[3], (embed_dim,), embed_dim),
        'w1': u(ks[4], (hidden_dim, embed_dim), embed_dim),
        'b1': u(ks[5], (hidden_dim,), embed_dim),
        'w2': u(ks[6], (embed_dim, hidden_dim), hidden_dim),
        'b2': u(ks[7], (embed_dim,), hidden_dim),
        'ln1_g': jnp.ones((embed_dim,), jnp.float32),
        'ln1_b': jnp.zeros((embed_dim,), jnp.float32),
        'ln2_g': jnp.ones((embed_dim,), jnp.float32),
        'ln2_b': jnp.zeros((embed_dim,), jnp.float32),
    }


if __name__ == "__main__":
    # Small deterministic test shapes consistent with the module.
    B, S = 2, 8
    VOCAB, E, H, HFF, LAYERS, MAXLEN = 128, 32, 4, 64, 2, 16

    root = jax.random.PRNGKey(0)
    keys = jax.random.split(root, 2 + LAYERS)
    k_emb, k_ids, layer_keys = keys[0], keys[1], keys[2:]

    params = {
        'embedding': jax.random.normal(k_emb, (VOCAB, E), jnp.float32),
        'pe': _positional_encoding(MAXLEN, E),
        'layers': [_init_layer_params(k, E, HFF) for k in layer_keys],
    }
    input_ids = jax.random.randint(k_ids, (B, S), 0, VOCAB, dtype=jnp.int32)

    out = text_encoder_forward(input_ids, params, H)
    out = jax.block_until_ready(out)

    ref = _reference(input_ids, params, H)
    assert out.shape == (B, S, E)
    assert jnp.allclose(out, ref, atol=2e-4, rtol=2e-4), "output mismatch"

    print("KERNEL_OK")
</pallas_src>

<mosaic_0001>
module attributes {stable_mosaic.version = 11 : i64} {
  func.func @_text_encoder_kernel(%arg0: i32, %arg1: i32, %arg2: memref<2x8xi32, #tpu.memory_space<smem>>, %arg3: memref<128x32xf32, #tpu.memory_space<vmem>>, %arg4: memref<8x32xf32, #tpu.memory_space<vmem>>, %arg5: memref<1x32x96xf32, #tpu.memory_space<vmem>>, %arg6: memref<1x1x96xf32, #tpu.memory_space<vmem>>, %arg7: memref<1x32x32xf32, #tpu.memory_space<vmem>>, %arg8: memref<1x1x32xf32, #tpu.memory_space<vmem>>, %arg9: memref<1x1x32xf32, #tpu.memory_space<vmem>>, %arg10: memref<1x1x32xf32, #tpu.memory_space<vmem>>, %arg11: memref<1x32x64xf32, #tpu.memory_space<vmem>>, %arg12: memref<1x1x64xf32, #tpu.memory_space<vmem>>, %arg13: memref<1x64x32xf32, #tpu.memory_space<vmem>>, %arg14: memref<1x1x32xf32, #tpu.memory_space<vmem>>, %arg15: memref<1x1x32xf32, #tpu.memory_space<vmem>>, %arg16: memref<1x1x32xf32, #tpu.memory_space<vmem>>, %arg17: memref<1x8x32xf32, #tpu.memory_space<vmem>>, %arg18: memref<8x32xf32, #tpu.memory_space<vmem>>) attributes {dimension_semantics = [#tpu.dimension_semantics<parallel>, #tpu.dimension_semantics<arbitrary>], iteration_bounds = array<i64: 2, 2>, scalar_prefetch = 1 : i64, scratch_operands = 1 : i64, tpu.core_type = #tpu.core_type<tc>, window_params = [{pipeline_mode = #tpu.pipeline_mode<synchronous>, transform_indices = @transform_0, window_bounds = array<i64: 128, 32>}, {pipeline_mode = #tpu.pipeline_mode<synchronous>, transform_indices = @transform_1, window_bounds = array<i64: 8, 32>}, {transform_indices = @transform_2, window_bounds = array<i64: 1, 32, 96>}, {transform_indices = @transform_3, window_bounds = array<i64: 1, 1, 96>}, {transform_indices = @transform_4, window_bounds = array<i64: 1, 32, 32>}, {transform_indices = @transform_5, window_bounds = array<i64: 1, 1, 32>}, {transform_indices = @transform_6, window_bounds = array<i64: 1, 1, 32>}, {transform_indices = @transform_7, window_bounds = array<i64: 1, 1, 32>}, {transform_indices = @transform_8, window_bounds = array<i64: 1, 32, 64>}, {transform_indices = @transform_9, window_bounds = array<i64: 1, 1, 64>}, {transform_indices = @transform_10, window_bounds = array<i64: 1, 64, 32>}, {transform_indices = @transform_11, window_bounds = array<i64: 1, 1, 32>}, {transform_indices = @transform_12, window_bounds = array<i64: 1, 1, 32>}, {transform_indices = @transform_13, window_bounds = array<i64: 1, 1, 32>}, {transform_indices = @transform_14, window_bounds = array<i64: 1, 8, 32>}]} {
    %c0_i32 = arith.constant 0 : i32
    %0 = arith.cmpi eq, %arg1, %c0_i32 : i32
    %1 = arith.extui %0 : i1 to i32
    %c0_i32_0 = arith.constant 0 : i32
    %2 = arith.cmpi ne, %1, %c0_i32_0 : i32
    scf.if %2 {
      %168 = arith.index_cast %arg0 : i32 to index
      %c0_83 = arith.constant 0 : index
      %169 = memref.load %arg2[%168, %c0_83] : memref<2x8xi32, #tpu.memory_space<smem>>
      %170 = arith.index_cast %169 : i32 to index
      %c0_84 = arith.constant 0 : index
      %171 = vector.load %arg3[%170, %c0_84] : memref<128x32xf32, #tpu.memory_space<vmem>>, vector<1x32xf32>
      %c0_85 = arith.constant 0 : index
      %c0_86 = arith.constant 0 : index
      %172 = vector.load %arg4[%c0_85, %c0_86] : memref<8x32xf32, #tpu.memory_space<vmem>>, vector<1x32xf32>
      %173 = arith.addf %171, %172 : vector<1x32xf32>
      %c0_87 = arith.constant 0 : index
      %c0_88 = arith.constant 0 : index
      %c0_89 = arith.constant 0 : index
      %174 = vector.load %arg17[%c0_87, %c0_88, %c0_89] : memref<1x8x32xf32, #tpu.memory_space<vmem>>, vector<1x1x32xf32>
      %175 = vector.shape_cast %174 : vector<1x1x32xf32> to vector<1x32xf32>
      %176 = vector.shape_cast %173 : vector<1x32xf32> to vector<1x1x32xf32>
      tpu.vector_store %arg17[%c0_87, %c0_88, %c0_89], %176 {strides = array<i32>} : memref<1x8x32xf32, #tpu.memory_space<vmem>>, vector<1x1x32xf32>,
      %177 = arith.index_cast %arg0 : i32 to index
      %c1 = arith.constant 1 : index
      %178 = memref.load %arg2[%177, %c1] : memref<2x8xi32, #tpu.memory_space<smem>>
      %179 = arith.index_cast %178 : i32 to index
      %c0_90 = arith.constant 0 : index
      %180 = vector.load %arg3[%179, %c0_90] : memref<128x32xf32, #tpu.memory_space<vmem>>, vector<1x32xf32>
      %c1_91 = arith.constant 1 : index
      %c0_92 = arith.constant 0 : index
      %181 = vector.load %arg4[%c1_91, %c0_92] : memref<8x32xf32, #tpu.memory_space<vmem>>, vector<1x32xf32>
      %182 = arith.addf %180, %181 : vector<1x32xf32>
      %c0_93 = arith.constant 0 : index
      %c1_94 = arith.constant 1 : index
      %c0_95 = arith.constant 0 : index
      %183 = vector.load %arg17[%c0_93, %c1_94, %c0_95] : memref<1x8x32xf32, #tpu.memory_space<vmem>>, vector<1x1x32xf32>
      %184 = vector.shape_cast %183 : vector<1x1x32xf32> to vector<1x32xf32>
      %185 = vector.shape_cast %182 : vector<1x32xf32> to vector<1x1x32xf32>
      tpu.vector_store %arg17[%c0_93, %c1_94, %c0_95], %185 {strides = array<i32>} : memref<1x8x32xf32, #tpu.memory_space<vmem>>, vector<1x1x32xf32>,
      %186 = arith.index_cast %arg0 : i32 to index
      %c2 = arith.constant 2 : index
      %187 = memref.load %arg2[%186, %c2] : memref<2x8xi32, #tpu.memory_space<smem>>
      %188 = arith.index_cast %187 : i32 to index
      %c0_96 = arith.constant 0 : index
      %189 = vector.load %arg3[%188, %c0_96] : memref<128x32xf32, #tpu.memory_space<vmem>>, vector<1x32xf32>
      %c2_97 = arith.constant 2 : index
      %c0_98 = arith.constant 0 : index
      %190 = vector.load %arg4[%c2_97, %c0_98] : memref<8x32xf32, #tpu.memory_space<vmem>>, vector<1x32xf32>
      %191 = arith.addf %189, %190 : vector<1x32xf32>
      %c0_99 = arith.constant 0 : index
      %c2_100 = arith.constant 2 : index
      %c0_101 = arith.constant 0 : index
      %192 = vector.load %arg17[%c0_99, %c2_100, %c0_101] : memref<1x8x32xf32, #tpu.memory_space<vmem>>, vector<1x1x32xf32>
      %193 = vector.shape_cast %192 : vector<1x1x32xf32> to vector<1x32xf32>
      %194 = vector.shape_cast %191 : vector<1x32xf32> to vector<1x1x32xf32>
      tpu.vector_store %arg17[%c0_99, %c2_100, %c0_101], %194 {strides = array<i32>} : memref<1x8x32xf32, #tpu.memory_space<vmem>>, vector<1x1x32xf32>,
      %195 = arith.index_cast %arg0 : i32 to index
      %c3 = arith.constant 3 : index
      %196 = memref.load %arg2[%195, %c3] : memref<2x8xi32, #tpu.memory_space<smem>>
      %197 = arith.index_cast %196 : i32 to index
      %c0_102 = arith.constant 0 : index
      %198 = vector.load %arg3[%197, %c0_102] : memref<128x32xf32, #tpu.memory_space<vmem>>, vector<1x32xf32>
      %c3_103 = arith.constant 3 : index
      %c0_104 = arith.constant 0 : index
      %199 = vector.load %arg4[%c3_103, %c0_104] : memref<8x32xf32, #tpu.memory_space<vmem>>, vector<1x32xf32>
      %200 = arith.addf %198, %199 : vector<1x32xf32>
      %c0_105 = arith.constant 0 : index
      %c3_106 = arith.constant 3 : index
      %c0_107 = arith.constant 0 : index
      %201 = vector.load %arg17[%c0_105, %c3_106, %c0_107] : memref<1x8x32xf32, #tpu.memory_space<vmem>>, vector<1x1x32xf32>
      %202 = vector.shape_cast %201 : vector<1x1x32xf32> to vector<1x32xf32>
      %203 = vector.shape_cast %200 : vector<1x32xf32> to vector<1x1x32xf32>
      tpu.vector_store %arg17[%c0_105, %c3_106, %c0_107], %203 {strides = array<i32>} : memref<1x8x32xf32, #tpu.memory_space<vmem>>, vector<1x1x32xf32>,
      %204 = arith.index_cast %arg0 : i32 to index
      %c4 = arith.constant 4 : index
      %205 = memref.load %arg2[%204, %c4] : memref<2x8xi32, #tpu.memory_space<smem>>
      %206 = arith.index_cast %205 : i32 to index
      %c0_108 = arith.constant 0 : index
      %207 = vector.load %arg3[%206, %c0_108] : memref<128x32xf32, #tpu.memory_space<vmem>>, vector<1x32xf32>
      %c4_109 = arith.constant 4 : index
      %c0_110 = arith.constant 0 : index
      %208 = vector.load %arg4[%c4_109, %c0_110] : memref<8x32xf32, #tpu.memory_space<vmem>>, vector<1x32xf32>
      %209 = arith.addf %207, %208 : vector<1x32xf32>
      %c0_111 = arith.constant 0 : index
      %c4_112 = arith.constant 4 : index
      %c0_113 = arith.constant 0 : index
      %210 = vector.load %arg17[%c0_111, %c4_112, %c0_113] : memref<1x8x32xf32, #tpu.memory_space<vmem>>, vector<1x1x32xf32>
      %211 = vector.shape_cast %210 : vector<1x1x32xf32> to vector<1x32xf32>
      %212 = vector.shape_cast %209 : vector<1x32xf32> to vector<1x1x32xf32>
      tpu.vector_store %arg17[%c0_111, %c4_112, %c0_113], %212 {strides = array<i32>} : memref<1x8x32xf32, #tpu.memory_space<vmem>>, vector<1x1x32xf32>,
      %213 = arith.index_cast %arg0 : i32 to index
      %c5 = arith.constant 5 : index
      %214 = memref.load %arg2[%213, %c5] : memref<2x8xi32, #tpu.memory_space<smem>>
      %215 = arith.index_cast %214 : i32 to index
      %c0_114 = arith.constant 0 : index
      %216 = vector.load %arg3[%215, %c0_114] : memref<128x32xf32, #tpu.memory_space<vmem>>, vector<1x32xf32>
      %c5_115 = arith.constant 5 : index
      %c0_116 = arith.constant 0 : index
      %217 = vector.load %arg4[%c5_115, %c0_116] : memref<8x32xf32, #tpu.memory_space<vmem>>, vector<1x32xf32>
      %218 = arith.addf %216, %217 : vector<1x32xf32>
      %c0_117 = arith.constant 0 : index
      %c5_118 = arith.constant 5 : index
      %c0_119 = arith.constant 0 : index
      %219 = vector.load %arg17[%c0_117, %c5_118, %c0_119] : memref<1x8x32xf32, #tpu.memory_space<vmem>>, vector<1x1x32xf32>
      %220 = vector.shape_cast %219 : vector<1x1x32xf32> to vector<1x32xf32>
      %221 = vector.shape_cast %218 : vector<1x32xf32> to vector<1x1x32xf32>
      tpu.vector_store %arg17[%c0_117, %c5_118, %c0_119], %221 {strides = array<i32>} : memref<1x8x32xf32, #tpu.memory_space<vmem>>, vector<1x1x32xf32>,
      %222 = arith.index_cast %arg0 : i32 to index
      %c6 = arith.constant 6 : index
      %223 = memref.load %arg2[%222, %c6] : memref<2x8xi32, #tpu.memory_space<smem>>
      %224 = arith.index_cast %223 : i32 to index
      %c0_120 = arith.constant 0 : index
      %225 = vector.load %arg3[%224, %c0_120] : memref<128x32xf32, #tpu.memory_space<vmem>>, vector<1x32xf32>
      %c6_121 = arith.constant 6 : index
      %c0_122 = arith.constant 0 : index
      %226 = vector.load %arg4[%c6_121, %c0_122] : memref<8x32xf32, #tpu.memory_space<vmem>>, vector<1x32xf32>
      %227 = arith.addf %225, %226 : vector<1x32xf32>
      %c0_123 = arith.constant 0 : index
      %c6_124 = arith.constant 6 : index
      %c0_125 = arith.constant 0 : index
      %228 = vector.load %arg17[%c0_123, %c6_124, %c0_125] : memref<1x8x32xf32, #tpu.memory_space<vmem>>, vector<1x1x32xf32>
      %229 = vector.shape_cast %228 : vector<1x1x32xf32> to vector<1x32xf32>
      %230 = vector.shape_cast %227 : vector<1x32xf32> to vector<1x1x32xf32>
      tpu.vector_store %arg17[%c0_123, %c6_124, %c0_125], %230 {strides = array<i32>} : memref<1x8x32xf32, #tpu.memory_space<vmem>>, vector<1x1x32xf32>,
      %231 = arith.index_cast %arg0 : i32 to index
      %c7 = arith.constant 7 : index
      %232 = memref.load %arg2[%231, %c7] : memref<2x8xi32, #tpu.memory_space<smem>>
      %233 = arith.index_cast %232 : i32 to index
      %c0_126 = arith.constant 0 : index
      %234 = vector.load %arg3[%233, %c0_126] : memref<128x32xf32, #tpu.memory_space<vmem>>, vector<1x32xf32>
      %c7_127 = arith.constant 7 : index
      %c0_128 = arith.constant 0 : index
      %235 = vector.load %arg4[%c7_127, %c0_128] : memref<8x32xf32, #tpu.memory_space<vmem>>, vector<1x32xf32>
      %236 = arith.addf %234, %235 : vector<1x32xf32>
      %c0_129 = arith.constant 0 : index
      %c7_130 = arith.constant 7 : index
      %c0_131 = arith.constant 0 : index
      %237 = vector.load %arg17[%c0_129, %c7_130, %c0_131] : memref<1x8x32xf32, #tpu.memory_space<vmem>>, vector<1x1x32xf32>
      %238 = vector.shape_cast %237 : vector<1x1x32xf32> to vector<1x32xf32>
      %239 = vector.shape_cast %236 : vector<1x32xf32> to vector<1x1x32xf32>
      tpu.vector_store %arg17[%c0_129, %c7_130, %c0_131], %239 {strides = array<i32>} : memref<1x8x32xf32, #tpu.memory_space<vmem>>, vector<1x1x32xf32>,
    } else {
    }
    %c0 = arith.constant 0 : index
    %c0_1 = arith.constant 0 : index
    %c0_2 = arith.constant 0 : index
    %3 = vector.load %arg17[%c0, %c0_1, %c0_2] : memref<1x8x32xf32, #tpu.memory_space<vmem>>, vector<1x8x32xf32>
    %4 = vector.shape_cast %3 : vector<1x8x32xf32> to vector<8x32xf32>
    %c0_3 = arith.constant 0 : index
    %c0_4 = arith.constant 0 : index
    %c0_5 = arith.constant 0 : index
    %5 = vector.load %arg5[%c0_3, %c0_4, %c0_5] : memref<1x32x96xf32, #tpu.memory_space<vmem>>, vector<1x32x96xf32>
    %6 = vector.shape_cast %5 : vector<1x32x96xf32> to vector<32x96xf32>
    %cst = arith.constant dense<0.000000e+00> : vector<8x96xf32>
    %7 = tpu.matmul %4, %6, %cst {dimension_numbers = #tpu.dot_dimension_numbers<[1], [0], [0], [1], [0, 0, 1, 1], [], []>} : vector<8x32xf32>, vector<32x96xf32>, vector<8x96xf32> -> vector<8x96xf32>
    %c0_6 = arith.constant 0 : index
    %c0_7 = arith.constant 0 : index
    %c0_8 = arith.constant 0 : index
    %8 = vector.load %arg6[%c0_6, %c0_7, %c0_8] : memref<1x1x96xf32, #tpu.memory_space<vmem>>, vector<1x1x96xf32>
    %9 = vector.shape_cast %8 : vector<1x1x96xf32> to vector<1x96xf32>
    %10 = vector.broadcast %9 : vector<1x96xf32> to vector<8x96xf32>
    %11 = arith.addf %7, %10 : vector<8x96xf32>
    %12 = vector.extract_strided_slice %11 {offsets = [0, 0], sizes = [8, 32], strides = [1, 1]} : vector<8x96xf32> to vector<8x32xf32>
    %13 = vector.extract_strided_slice %11 {offsets = [0, 32], sizes = [8, 32], strides = [1, 1]} : vector<8x96xf32> to vector<8x32xf32>
    %14 = vector.extract_strided_slice %11 {offsets = [0, 64], sizes = [8, 32], strides = [1, 1]} : vector<8x96xf32> to vector<8x32xf32>
    %15 = vector.extract_strided_slice %12 {offsets = [0, 0], sizes = [8, 8], strides = [1, 1]} : vector<8x32xf32> to vector<8x8xf32>
    %cst_9 = arith.constant 0.353553385 : f32
    %16 = vector.broadcast %cst_9 : f32 to vector<8x8xf32>
    %17 = arith.mulf %15, %16 : vector<8x8xf32>
    %18 = vector.extract_strided_slice %13 {offsets = [0, 0], sizes = [8, 8], strides = [1, 1]} : vector<8x32xf32> to vector<8x8xf32>
    %19 = vector.extract_strided_slice %14 {offsets = [0, 0], sizes = [8, 8], strides = [1, 1]} : vector<8x32xf32> to vector<8x8xf32>
    "tpu.trace_start"() <{level = 10 : i32, message = "qd,kd->qk"}> : () -> ()
    %cst_10 = arith.constant dense<0.000000e+00> : vector<8x8xf32>
    %20 = tpu.matmul %17, %18, %cst_10 {dimension_numbers = #tpu.dot_dimension_numbers<[1], [1], [0], [0], [0, 0, 1, 0], [], []>} : vector<8x8xf32>, vector<8x8xf32>, vector<8x8xf32> -> vector<8x8xf32>
    "tpu.trace_stop"() : () -> ()
    %cst_11 = arith.constant dense<0xFF800000> : vector<8xf32>
    %21 = vector.multi_reduction <maximumf>, %20, %cst_11 [1] : vector<8x8xf32> to vector<8xf32>
    %22 = vector.shape_cast %21 : vector<8xf32> to vector<8x1xf32>
    %23 = vector.broadcast %22 : vector<8x1xf32> to vector<8x8xf32>
    %24 = arith.subf %20, %23 : vector<8x8xf32>
    %25 = math.exp %24 : vector<8x8xf32>
    %cst_12 = arith.constant dense<0.000000e+00> : vector<8xf32>
    %26 = vector.multi_reduction <add>, %25, %cst_12 [1] : vector<8x8xf32> to vector<8xf32>
    %27 = vector.shape_cast %26 : vector<8xf32> to vector<8x1xf32>
    %cst_13 = arith.constant dense<0.000000e+00> : vector<8x8xf32>
    %28 = tpu.matmul %25, %19, %cst_13 {dimension_numbers = #tpu.dot_dimension_numbers<[1], [0], [0], [1], [0, 0, 1, 1], [], []>} : vector<8x8xf32>, vector<8x8xf32>, vector<8x8xf32> -> vector<8x8xf32>
    %29 = tpu.reciprocal %27 : vector<8x1xf32> -> vector<8x1xf32>
    %30 = vector.broadcast %29 : vector<8x1xf32> to vector<8x8xf32>
    %31 = arith.mulf %28, %30 : vector<8x8xf32>
    %c0_14 = arith.constant 0 : index
    %c0_15 = arith.constant 0 : index
    %32 = vector.load %arg18[%c0_14, %c0_15] : memref<8x32xf32, #tpu.memory_space<vmem>>, vector<8x8xf32>
    tpu.vector_store %arg18[%c0_14, %c0_15], %31 {strides = array<i32>} : memref<8x32xf32, #tpu.memory_space<vmem>>, vector<8x8xf32>,
    %33 = vector.extract_strided_slice %12 {offsets = [0, 8], sizes = [8, 8], strides = [1, 1]} : vector<8x32xf32> to vector<8x8xf32>
    %cst_16 = arith.constant 0.353553385 : f32
    %34 = vector.broadcast %cst_16 : f32 to vector<8x8xf32>
    %35 = arith.mulf %33, %34 : vector<8x8xf32>
    %36 = vector.extract_strided_slice %13 {offsets = [0, 8], sizes = [8, 8], strides = [1, 1]} : vector<8x32xf32> to vector<8x8xf32>
    %37 = vector.extract_strided_slice %14 {offsets = [0, 8], sizes = [8, 8], strides = [1, 1]} : vector<8x32xf32> to vector<8x8xf32>
    "tpu.trace_start"() <{level = 10 : i32, message = "qd,kd->qk"}> : () -> ()
    %cst_17 = arith.constant dense<0.000000e+00> : vector<8x8xf32>
    %38 = tpu.matmul %35, %36, %cst_17 {dimension_numbers = #tpu.dot_dimension_numbers<[1], [1], [0], [0], [0, 0, 1, 0], [], []>} : vector<8x8xf32>, vector<8x8xf32>, vector<8x8xf32> -> vector<8x8xf32>
    "tpu.trace_stop"() : () -> ()
    %cst_18 = arith.constant dense<0xFF800000> : vector<8xf32>
    %39 = vector.multi_reduction <maximumf>, %38, %cst_18 [1] : vector<8x8xf32> to vector<8xf32>
    %40 = vector.shape_cast %39 : vector<8xf32> to vector<8x1xf32>
    %41 = vector.broadcast %40 : vector<8x1xf32> to vector<8x8xf32>
    %42 = arith.subf %38, %41 : vector<8x8xf32>
    %43 = math.exp %42 : vector<8x8xf32>
    %cst_19 = arith.constant dense<0.000000e+00> : vector<8xf32>
    %44 = vector.multi_reduction <add>, %43, %cst_19 [1] : vector<8x8xf32> to vector<8xf32>
    %45 = vector.shape_cast %44 : vector<8xf32> to vector<8x1xf32>
    %cst_20 = arith.constant dense<0.000000e+00> : vector<8x8xf32>
    %46 = tpu.matmul %43, %37, %cst_20 {dimension_numbers = #tpu.dot_dimension_numbers<[1], [0], [0], [1], [0, 0, 1, 1], [], []>} : vector<8x8xf32>, vector<8x8xf32>, vector<8x8xf32> -> vector<8x8xf32>
    %47 = tpu.reciprocal %45 : vector<8x1xf32> -> vector<8x1xf32>
    %48 = vector.broadcast %47 : vector<8x1xf32> to vector<8x8xf32>
    %49 = arith.mulf %46, %48 : vector<8x8xf32>
    %c0_21 = arith.constant 0 : index
    %c8 = arith.constant 8 : index
    %50 = vector.load %arg18[%c0_21, %c8] : memref<8x32xf32, #tpu.memory_space<vmem>>, vector<8x8xf32>
    tpu.vector_store %arg18[%c0_21, %c8], %49 {strides = array<i32>} : memref<8x32xf32, #tpu.memory_space<vmem>>, vector<8x8xf32>,
    %51 = vector.extract_strided_slice %12 {offsets = [0, 16], sizes = [8, 8], strides = [1, 1]} : vector<8x32xf32> to vector<8x8xf32>
    %cst_22 = arith.constant 0.353553385 : f32
    %52 = vector.broadcast %cst_22 : f32 to vector<8x8xf32>
    %53 = arith.mulf %51, %52 : vector<8x8xf32>
    %54 = vector.extract_strided_slice %13 {offsets = [0, 16], sizes = [8, 8], strides = [1, 1]} : vector<8x32xf32> to vector<8x8xf32>
    %55 = vector.extract_strided_slice %14 {offsets = [0, 16], sizes = [8, 8], strides = [1, 1]} : vector<8x32xf32> to vector<8x8xf32>
    "tpu.trace_start"() <{level = 10 : i32, message = "qd,kd->qk"}> : () -> ()
    %cst_23 = arith.constant dense<0.000000e+00> : vector<8x8xf32>
    %56 = tpu.matmul %53, %54, %cst_23 {dimension_numbers = #tpu.dot_dimension_numbers<[1], [1], [0], [0], [0, 0, 1, 0], [], []>} : vector<8x8xf32>, vector<8x8xf32>, vector<8x8xf32> -> vector<8x8xf32>
    "tpu.trace_stop"() : () -> ()
    %cst_24 = arith.constant dense<0xFF800000> : vector<8xf32>
    %57 = vector.multi_reduction <maximumf>, %56, %cst_24 [1] : vector<8x8xf32> to vector<8xf32>
    %58 = vector.shape_cast %57 : vector<8xf32> to vector<8x1xf32>
    %59 = vector.broadcast %58 : vector<8x1xf32> to vector<8x8xf32>
    %60 = arith.subf %56, %59 : vector<8x8xf32>
    %61 = math.exp %60 : vector<8x8xf32>
    %cst_25 = arith.constant dense<0.000000e+00> : vector<8xf32>
    %62 = vector.multi_reduction <add>, %61, %cst_25 [1] : vector<8x8xf32> to vector<8xf32>
    %63 = vector.shape_cast %62 : vector<8xf32> to vector<8x1xf32>
    %cst_26 = arith.constant dense<0.000000e+00> : vector<8x8xf32>
    %64 = tpu.matmul %61, %55, %cst_26 {dimension_numbers = #tpu.dot_dimension_numbers<[1], [0], [0], [1], [0, 0, 1, 1], [], []>} : vector<8x8xf32>, vector<8x8xf32>, vector<8x8xf32> -> vector<8x8xf32>
    %65 = tpu.reciprocal %63 : vector<8x1xf32> -> vector<8x1xf32>
    %66 = vector.broadcast %65 : vector<8x1xf32> to vector<8x8xf32>
    %67 = arith.mulf %64, %66 : vector<8x8xf32>
    %c0_27 = arith.constant 0 : index
    %c16 = arith.constant 16 : index
    %68 = vector.load %arg18[%c0_27, %c16] : memref<8x32xf32, #tpu.memory_space<vmem>>, vector<8x8xf32>
    tpu.vector_store %arg18[%c0_27, %c16], %67 {strides = array<i32>} : memref<8x32xf32, #tpu.memory_space<vmem>>, vector<8x8xf32>,
    %69 = vector.extract_strided_slice %12 {offsets = [0, 24], sizes = [8, 8], strides = [1, 1]} : vector<8x32xf32> to vector<8x8xf32>
    %cst_28 = arith.constant 0.353553385 : f32
    %70 = vector.broadcast %cst_28 : f32 to vector<8x8xf32>
    %71 = arith.mulf %69, %70 : vector<8x8xf32>
    %72 = vector.extract_strided_slice %13 {offsets = [0, 24], sizes = [8, 8], strides = [1, 1]} : vector<8x32xf32> to vector<8x8xf32>
    %73 = vector.extract_strided_slice %14 {offsets = [0, 24], sizes = [8, 8], strides = [1, 1]} : vector<8x32xf32> to vector<8x8xf32>
    "tpu.trace_start"() <{level = 10 : i32, message = "qd,kd->qk"}> : () -> ()
    %cst_29 = arith.constant dense<0.000000e+00> : vector<8x8xf32>
    %74 = tpu.matmul %71, %72, %cst_29 {dimension_numbers = #tpu.dot_dimension_numbers<[1], [1], [0], [0], [0, 0, 1, 0], [], []>} : vector<8x8xf32>, vector<8x8xf32>, vector<8x8xf32> -> vector<8x8xf32>
    "tpu.trace_stop"() : () -> ()
    %cst_30 = arith.constant dense<0xFF800000> : vector<8xf32>
    %75 = vector.multi_reduction <maximumf>, %74, %cst_30 [1] : vector<8x8xf32> to vector<8xf32>
    %76 = vector.shape_cast %75 : vector<8xf32> to vector<8x1xf32>
    %77 = vector.broadcast %76 : vector<8x1xf32> to vector<8x8xf32>
    %78 = arith.subf %74, %77 : vector<8x8xf32>
    %79 = math.exp %78 : vector<8x8xf32>
    %cst_31 = arith.constant dense<0.000000e+00> : vector<8xf32>
    %80 = vector.multi_reduction <add>, %79, %cst_31 [1] : vector<8x8xf32> to vector<8xf32>
    %81 = vector.shape_cast %80 : vector<8xf32> to vector<8x1xf32>
    %cst_32 = arith.constant dense<0.000000e+00> : vector<8x8xf32>
    %82 = tpu.matmul %79, %73, %cst_32 {dimension_numbers = #tpu.dot_dimension_numbers<[1], [0], [0], [1], [0, 0, 1, 1], [], []>} : vector<8x8xf32>, vector<8x8xf32>, vector<8x8xf32> -> vector<8x8xf32>
    %83 = tpu.reciprocal %81 : vector<8x1xf32> -> vector<8x1xf32>
    %84 = vector.broadcast %83 : vector<8x1xf32> to vector<8x8xf32>
    %85 = arith.mulf %82, %84 : vector<8x8xf32>
    %c0_33 = arith.constant 0 : index
    %c24 = arith.constant 24 : index
    %86 = vector.load %arg18[%c0_33, %c24] : memref<8x32xf32, #tpu.memory_space<vmem>>, vector<8x8xf32>
    tpu.vector_store %arg18[%c0_33, %c24], %85 {strides = array<i32>} : memref<8x32xf32, #tpu.memory_space<vmem>>, vector<8x8xf32>,
    %c0_34 = arith.constant 0 : index
    %c0_35 = arith.constant 0 : index
    %87 = vector.load %arg18[%c0_34, %c0_35] : memref<8x32xf32, #tpu.memory_space<vmem>>, vector<8x32xf32>
    %c0_36 = arith.constant 0 : index
    %c0_37 = arith.constant 0 : index
    %c0_38 = arith.constant 0 : index
    %88 = vector.load %arg7[%c0_36, %c0_37, %c0_38] : memref<1x32x32xf32, #tpu.memory_space<vmem>>, vector<1x32x32xf32>
    %89 = vector.shape_cast %88 : vector<1x32x32xf32> to vector<32x32xf32>
    %cst_39 = arith.constant dense<0.000000e+00> : vector<8x32xf32>
    %90 = tpu.matmul %87, %89, %cst_39 {dimension_numbers = #tpu.dot_dimension_numbers<[1], [0], [0], [1], [0, 0, 1, 1], [], []>} : vector<8x32xf32>, vector<32x32xf32>, vector<8x32xf32> -> vector<8x32xf32>
    %c0_40 = arith.constant 0 : index
    %c0_41 = arith.constant 0 : index
    %c0_42 = arith.constant 0 : index
    %91 = vector.load %arg8[%c0_40, %c0_41, %c0_42] : memref<1x1x32xf32, #tpu.memory_space<vmem>>, vector<1x1x32xf32>
    %92 = vector.shape_cast %91 : vector<1x1x32xf32> to vector<1x32xf32>
    %93 = vector.broadcast %92 : vector<1x32xf32> to vector<8x32xf32>
    %94 = arith.addf %90, %93 : vector<8x32xf32>
    %95 = arith.addf %4, %94 : vector<8x32xf32>
    %cst_43 = arith.constant dense<0.000000e+00> : vector<8xf32>
    %96 = vector.multi_reduction <add>, %95, %cst_43 [1] : vector<8x32xf32> to vector<8xf32>
    %97 = vector.shape_cast %96 : vector<8xf32> to vector<8x1xf32>
    %cst_44 = arith.constant 3.200000e+01 : f32
    %98 = vector.broadcast %cst_44 : f32 to vector<8x1xf32>
    %99 = arith.divf %97, %98 : vector<8x1xf32>
    %100 = vector.broadcast %99 : vector<8x1xf32> to vector<8x32xf32>
    %101 = arith.subf %95, %100 : vector<8x32xf32>
    %102 = arith.mulf %101, %101 : vector<8x32xf32>
    %cst_45 = arith.constant dense<0.000000e+00> : vector<8xf32>
    %103 = vector.multi_reduction <add>, %102, %cst_45 [1] : vector<8x32xf32> to vector<8xf32>
    %104 = vector.shape_cast %103 : vector<8xf32> to vector<8x1xf32>
    %cst_46 = arith.constant 3.200000e+01 : f32
    %105 = vector.broadcast %cst_46 : f32 to vector<8x1xf32>
    %106 = arith.divf %104, %105 : vector<8x1xf32>
    %107 = vector.broadcast %99 : vector<8x1xf32> to vector<8x32xf32>
    %108 = arith.subf %95, %107 : vector<8x32xf32>
    %cst_47 = arith.constant 9.99999974E-6 : f32
    %109 = vector.broadcast %cst_47 : f32 to vector<8x1xf32>
    %110 = arith.addf %106, %109 : vector<8x1xf32>
    %111 = math.rsqrt %110 : vector<8x1xf32>
    %112 = vector.broadcast %111 : vector<8x1xf32> to vector<8x32xf32>
    %113 = arith.mulf %108, %112 : vector<8x32xf32>
    %c0_48 = arith.constant 0 : index
    %c0_49 = arith.constant 0 : index
    %c0_50 = arith.constant 0 : index
    %114 = vector.load %arg9[%c0_48, %c0_49, %c0_50] : memref<1x1x32xf32, #tpu.memory_space<vmem>>, vector<1x1x32xf32>
    %115 = vector.shape_cast %114 : vector<1x1x32xf32> to vector<1x32xf32>
    %116 = vector.broadcast %115 : vector<1x32xf32> to vector<8x32xf32>
    %117 = arith.mulf %113, %116 : vector<8x32xf32>
    %c0_51 = arith.constant 0 : index
    %c0_52 = arith.constant 0 : index
    %c0_53 = arith.constant 0 : index
    %118 = vector.load %arg10[%c0_51, %c0_52, %c0_53] : memref<1x1x32xf32, #tpu.memory_space<vmem>>, vector<1x1x32xf32>
    %119 = vector.shape_cast %118 : vector<1x1x32xf32> to vector<1x32xf32>
    %120 = vector.broadcast %119 : vector<1x32xf32> to vector<8x32xf32>
    %121 = arith.addf %117, %120 : vector<8x32xf32>
    %c0_54 = arith.constant 0 : index
    %c0_55 = arith.constant 0 : index
    %c0_56 = arith.constant 0 : index
    %122 = vector.load %arg11[%c0_54, %c0_55, %c0_56] : memref<1x32x64xf32, #tpu.memory_space<vmem>>, vector<1x32x64xf32>
    %123 = vector.shape_cast %122 : vector<1x32x64xf32> to vector<32x64xf32>
    %cst_57 = arith.constant dense<0.000000e+00> : vector<8x64xf32>
    %124 = tpu.matmul %121, %123, %cst_57 {dimension_numbers = #tpu.dot_dimension_numbers<[1], [0], [0], [1], [0, 0, 1, 1], [], []>} : vector<8x32xf32>, vector<32x64xf32>, vector<8x64xf32> -> vector<8x64xf32>
    %c0_58 = arith.constant 0 : index
    %c0_59 = arith.constant 0 : index
    %c0_60 = arith.constant 0 : index
    %125 = vector.load %arg12[%c0_58, %c0_59, %c0_60] : memref<1x1x64xf32, #tpu.memory_space<vmem>>, vector<1x1x64xf32>
    %126 = vector.shape_cast %125 : vector<1x1x64xf32> to vector<1x64xf32>
    %127 = vector.broadcast %126 : vector<1x64xf32> to vector<8x64xf32>
    %128 = arith.addf %124, %127 : vector<8x64xf32>
    %cst_61 = arith.constant 0.000000e+00 : f32
    %129 = vector.broadcast %cst_61 : f32 to vector<8x64xf32>
    %130 = arith.maximumf %128, %129 : vector<8x64xf32>
    %c0_62 = arith.constant 0 : index
    %c0_63 = arith.constant 0 : index
    %c0_64 = arith.constant 0 : index
    %131 = vector.load %arg13[%c0_62, %c0_63, %c0_64] : memref<1x64x32xf32, #tpu.memory_space<vmem>>, vector<1x64x32xf32>
    %132 = vector.shape_cast %131 : vector<1x64x32xf32> to vector<64x32xf32>
    %cst_65 = arith.constant dense<0.000000e+00> : vector<8x32xf32>
    %133 = tpu.matmul %130, %132, %cst_65 {dimension_numbers = #tpu.dot_dimension_numbers<[1], [0], [0], [1], [0, 0, 1, 1], [], []>} : vector<8x64xf32>, vector<64x32xf32>, vector<8x32xf32> -> vector<8x32xf32>
    %c0_66 = arith.constant 0 : index
    %c0_67 = arith.constant 0 : index
    %c0_68 = arith.constant 0 : index
    %134 = vector.load %arg14[%c0_66, %c0_67, %c0_68] : memref<1x1x32xf32, #tpu.memory_space<vmem>>, vector<1x1x32xf32>
    %135 = vector.shape_cast %134 : vector<1x1x32xf32> to vector<1x32xf32>
    %136 = vector.broadcast %135 : vector<1x32xf32> to vector<8x32xf32>
    %137 = arith.addf %133, %136 : vector<8x32xf32>
    %138 = arith.addf %121, %137 : vector<8x32xf32>
    %cst_69 = arith.constant dense<0.000000e+00> : vector<8xf32>
    %139 = vector.multi_reduction <add>, %138, %cst_69 [1] : vector<8x32xf32> to vector<8xf32>
    %140 = vector.shape_cast %139 : vector<8xf32> to vector<8x1xf32>
    %cst_70 = arith.constant 3.200000e+01 : f32
    %141 = vector.broadcast %cst_70 : f32 to vector<8x1xf32>
    %142 = arith.divf %140, %141 : vector<8x1xf32>
    %143 = vector.broadcast %142 : vector<8x1xf32> to vector<8x32xf32>
    %144 = arith.subf %138, %143 : vector<8x32xf32>
    %145 = arith.mulf %144, %144 : vector<8x32xf32>
    %cst_71 = arith.constant dense<0.000000e+00> : vector<8xf32>
    %146 = vector.multi_reduction <add>, %145, %cst_71 [1] : vector<8x32xf32> to vector<8xf32>
    %147 = vector.shape_cast %146 : vector<8xf32> to vector<8x1xf32>
    %cst_72 = arith.constant 3.200000e+01 : f32
    %148 = vector.broadcast %cst_72 : f32 to vector<8x1xf32>
    %149 = arith.divf %147, %148 : vector<8x1xf32>
    %150 = vector.broadcast %142 : vector<8x1xf32> to vector<8x32xf32>
    %151 = arith.subf %138, %150 : vector<8x32xf32>
    %cst_73 = arith.constant 9.99999974E-6 : f32
    %152 = vector.broadcast %cst_73 : f32 to vector<8x1xf32>
    %153 = arith.addf %149, %152 : vector<8x1xf32>
    %154 = math.rsqrt %153 : vector<8x1xf32>
    %155 = vector.broadcast %154 : vector<8x1xf32> to vector<8x32xf32>
    %156 = arith.mulf %151, %155 : vector<8x32xf32>
    %c0_74 = arith.constant 0 : index
    %c0_75 = arith.constant 0 : index
    %c0_76 = arith.constant 0 : index
    %157 = vector.load %arg15[%c0_74, %c0_75, %c0_76] : memref<1x1x32xf32, #tpu.memory_space<vmem>>, vector<1x1x32xf32>
    %158 = vector.shape_cast %157 : vector<1x1x32xf32> to vector<1x32xf32>
    %159 = vector.broadcast %158 : vector<1x32xf32> to vector<8x32xf32>
    %160 = arith.mulf %156, %159 : vector<8x32xf32>
    %c0_77 = arith.constant 0 : index
    %c0_78 = arith.constant 0 : index
    %c0_79 = arith.constant 0 : index
    %161 = vector.load %arg16[%c0_77, %c0_78, %c0_79] : memref<1x1x32xf32, #tpu.memory_space<vmem>>, vector<1x1x32xf32>
    %162 = vector.shape_cast %161 : vector<1x1x32xf32> to vector<1x32xf32>
    %163 = vector.broadcast %162 : vector<1x32xf32> to vector<8x32xf32>
    %164 = arith.addf %160, %163 : vector<8x32xf32>
    %c0_80 = arith.constant 0 : index
    %c0_81 = arith.constant 0 : index
    %c0_82 = arith.constant 0 : index
    %165 = vector.load %arg17[%c0_80, %c0_81, %c0_82] : memref<1x8x32xf32, #tpu.memory_space<vmem>>, vector<1x8x32xf32>
    %166 = vector.shape_cast %165 : vector<1x8x32xf32> to vector<8x32xf32>
    %167 = vector.shape_cast %164 : vector<8x32xf32> to vector<1x8x32xf32>
    tpu.vector_store %arg17[%c0_80, %c0_81, %c0_82], %167 {strides = array<i32>} : memref<1x8x32xf32, #tpu.memory_space<vmem>>, vector<1x8x32xf32>,
    return
  }
  func.func @transform_0(%arg0: i32, %arg1: i32, %arg2: memref<2x8xi32, #tpu.memory_space<smem>>) -> (i32, i32) {
    %c0_i32 = arith.constant 0 : i32
    %c0_i32_0 = arith.constant 0 : i32
    %c0_i32_1 = arith.constant 0 : i32
    return %c0_i32, %c0_i32_0 : i32, i32
  }
  func.func @transform_1(%arg0: i32, %arg1: i32, %arg2: memref<2x8xi32, #tpu.memory_space<smem>>) -> (i32, i32) {
    %c0_i32 = arith.constant 0 : i32
    %c0_i32_0 = arith.constant 0 : i32
    %c0_i32_1 = arith.constant 0 : i32
    return %c0_i32, %c0_i32_0 : i32, i32
  }
  func.func @transform_2(%arg0: i32, %arg1: i32, %arg2: memref<2x8xi32, #tpu.memory_space<smem>>) -> (i32, i32, i32) {
    %c0_i32 = arith.constant 0 : i32
    %c0_i32_0 = arith.constant 0 : i32
    %c0_i32_1 = arith.constant 0 : i32
    return %arg1, %c0_i32, %c0_i32_0 : i32, i32, i32
  }
  func.func @transform_3(%arg0: i32, %arg1: i32, %arg2: memref<2x8xi32, #tpu.memory_space<smem>>) -> (i32, i32, i32) {
    %c0_i32 = arith.constant 0 : i32
    %c0_i32_0 = arith.constant 0 : i32
    %c0_i32_1 = arith.constant 0 : i32
    return %arg1, %c0_i32, %c0_i32_0 : i32, i32, i32
  }
  func.func @transform_4(%arg0: i32, %arg1: i32, %arg2: memref<2x8xi32, #tpu.memory_space<smem>>) -> (i32, i32, i32) {
    %c0_i32 = arith.constant 0 : i32
    %c0_i32_0 = arith.constant 0 : i32
    %c0_i32_1 = arith.constant 0 : i32
    return %arg1, %c0_i32, %c0_i32_0 : i32, i32, i32
  }
  func.func @transform_5(%arg0: i32, %arg1: i32, %arg2: memref<2x8xi32, #tpu.memory_space<smem>>) -> (i32, i32, i32) {
    %c0_i32 = arith.constant 0 : i32
    %c0_i32_0 = arith.constant 0 : i32
    %c0_i32_1 = arith.constant 0 : i32
    return %arg1, %c0_i32, %c0_i32_0 : i32, i32, i32
  }
  func.func @transform_6(%arg0: i32, %arg1: i32, %arg2: memref<2x8xi32, #tpu.memory_space<smem>>) -> (i32, i32, i32) {
    %c0_i32 = arith.constant 0 : i32
    %c0_i32_0 = arith.constant 0 : i32
    %c0_i32_1 = arith.constant 0 : i32
    return %arg1, %c0_i32, %c0_i32_0 : i32, i32, i32
  }
  func.func @transform_7(%arg0: i32, %arg1: i32, %arg2: memref<2x8xi32, #tpu.memory_space<smem>>) -> (i32, i32, i32) {
    %c0_i32 = arith.constant 0 : i32
    %c0_i32_0 = arith.constant 0 : i32
    %c0_i32_1 = arith.constant 0 : i32
    return %arg1, %c0_i32, %c0_i32_0 : i32, i32, i32
  }
  func.func @transform_8(%arg0: i32, %arg1: i32, %arg2: memref<2x8xi32, #tpu.memory_space<smem>>) -> (i32, i32, i32) {
    %c0_i32 = arith.constant 0 : i32
    %c0_i32_0 = arith.constant 0 : i32
    %c0_i32_1 = arith.constant 0 : i32
    return %arg1, %c0_i32, %c0_i32_0 : i32, i32, i32
  }
  func.func @transform_9(%arg0: i32, %arg1: i32, %arg2: memref<2x8xi32, #tpu.memory_space<smem>>) -> (i32, i32, i32) {
    %c0_i32 = arith.constant 0 : i32
    %c0_i32_0 = arith.constant 0 : i32
    %c0_i32_1 = arith.constant 0 : i32
    return %arg1, %c0_i32, %c0_i32_0 : i32, i32, i32
  }
  func.func @transform_10(%arg0: i32, %arg1: i32, %arg2: memref<2x8xi32, #tpu.memory_space<smem>>) -> (i32, i32, i32) {
    %c0_i32 = arith.constant 0 : i32
    %c0_i32_0 = arith.constant 0 : i32
    %c0_i32_1 = arith.constant 0 : i32
    return %arg1, %c0_i32, %c0_i32_0 : i32, i32, i32
  }
  func.func @transform_11(%arg0: i32, %arg1: i32, %arg2: memref<2x8xi32, #tpu.memory_space<smem>>) -> (i32, i32, i32) {
    %c0_i32 = arith.constant 0 : i32
    %c0_i32_0 = arith.constant 0 : i32
    %c0_i32_1 = arith.constant 0 : i32
    return %arg1, %c0_i32, %c0_i32_0 : i32, i32, i32
  }
  func.func @transform_12(%arg0: i32, %arg1: i32, %arg2: memref<2x8xi32, #tpu.memory_space<smem>>) -> (i32, i32, i32) {
    %c0_i32 = arith.constant 0 : i32
    %c0_i32_0 = arith.constant 0 : i32
    %c0_i32_1 = arith.constant 0 : i32
    return %arg1, %c0_i32, %c0_i32_0 : i32, i32, i32
  }
  func.func @transform_13(%arg0: i32, %arg1: i32, %arg2: memref<2x8xi32, #tpu.memory_space<smem>>) -> (i32, i32, i32) {
    %c0_i32 = arith.constant 0 : i32
    %c0_i32_0 = arith.constant 0 : i32
    %c0_i32_1 = arith.constant 0 : i32
    return %arg1, %c0_i32, %c0_i32_0 : i32, i32, i32
  }
  func.func @transform_14(%arg0: i32, %arg1: i32, %arg2: memref<2x8xi32, #tpu.memory_space<smem>>) -> (i32, i32, i32) {
    %c0_i32 = arith.constant 0 : i32
    %c0_i32_0 = arith.constant 0 : i32
    %c0_i32_1 = arith.constant 0 : i32
    return %arg0, %c0_i32, %c0_i32_0 : i32, i32, i32
  }
}

</mosaic_0001>

<llo_original>
// kernel: tpu_custom_call.1
$region0: #{tpu_custom_call.1}
  #allocation0 [shape = 'u32[]', space=smem, size = 0x4, offset = 0x4, fixed_abs, tag = 'smem constant byte address 0x4 - core index']
  #allocation1 [shape = 'u32[144,128]{1,0:T(1,128)}', space=vmem, size = 0x12000, scoped, tag = 'internal scratch']
  #allocation2 [shape = 'f32[8,32]{1,0:T(8,128)}', space=vmem, size = 0x1000, scoped, tag = 'scratch operand']
  #allocation3 [shape = 's32[1]{0}', space=sflag, size = 0x4, scoped, tag = 'scoped memory for tpu_custom_call.1']
  #allocation4 [shape = 'u8[1024]{0}', space=smem, size = 0x400, scoped, tag = 'prefetched SMEM operand 0']
  %s0 = inlined_call_operand.vmem [shape: s32[2,8], index: 0, kind: input, shape index: {}]
  %s1 = inlined_call_operand.vmem [shape: f32[128,32], index: 1, kind: input, shape index: {}]
  %s2 = inlined_call_operand.vmem [shape: f32[8,32], index: 2, kind: input, shape index: {}]
  %s3 = inlined_call_operand.vmem [shape: f32[2,32,96], index: 3, kind: input, shape index: {}]
  %s4 = inlined_call_operand.vmem [shape: f32[2,1,96], index: 4, kind: input, shape index: {}]
  %s5 = inlined_call_operand.vmem [shape: f32[2,32,32], index: 5, kind: input, shape index: {}]
  %s6 = inlined_call_operand.vmem [shape: f32[2,1,32], index: 6, kind: input, shape index: {}]
  %s7 = inlined_call_operand.vmem [shape: f32[2,1,32], index: 7, kind: input, shape index: {}]
  %s8 = inlined_call_operand.vmem [shape: f32[2,1,32], index: 8, kind: input, shape index: {}]
  %s9 = inlined_call_operand.vmem [shape: f32[2,32,64], index: 9, kind: input, shape index: {}]
  %s10 = inlined_call_operand.vmem [shape: f32[2,1,64], index: 10, kind: input, shape index: {}]
  %s11 = inlined_call_operand.vmem [shape: f32[2,64,32], index: 11, kind: input, shape index: {}]
  %s12 = inlined_call_operand.vmem [shape: f32[2,1,32], index: 12, kind: input, shape index: {}]
  %s13 = inlined_call_operand.vmem [shape: f32[2,1,32], index: 13, kind: input, shape index: {}]
  %s14 = inlined_call_operand.vmem [shape: f32[2,1,32], index: 14, kind: input, shape index: {}]
  %s15 = inlined_call_operand.hbm [shape: f32[2,8,32], index: 15, kind: output, shape index: {}]
  %s16 = sld [smem:[#allocation0]]
  $region93: #{tpu_custom_call.1} parent=0
    _
  %s18 = ssub.s32 1, %s16
  %s19 = scalar_select 0, %s18, %s16
  %s20 = sshll.u32 %s0, 4
  %s21 = int_to_ptr.vmem [resolvable:$true] %s20
  %23 = dma.vmem_to_smem %s21, 32, [#allocation4], [#allocation3]
  %24 = dma.done [#allocation3], 32
  %25 = sfence
  $region1: #{tpu_custom_call.1} parent=0
    #allocation5 [shape = 'u8[8192]{0}', space=vmem, size = 0x2000, scoped, tag = 'output window, operand 0']
    #allocation6 [shape = 's32[2]{0}', space=sflag, size = 0x8, scoped, tag = 'scoped memory for tpu_custom_call.1']
    %26 = vsyncpa [#allocation6], 0
    %s27 = scalar_lea.sflag [#allocation6], 1
    %28 = vsyncpa %s27, 0
    loop: start=0, step=1, limit=6
    $region2: #{tpu_custom_call.1} parent=1 // loop_pre_header
      _
    $region3: #{tpu_custom_call.1} parent=1 // loop_header
      %s30 = sphi 0, %s34
      %p31 = scmp.ge.s32.totalorder %s30, 6
      %s37 = sphi 0, %s49
      %s38 = sphi 0, %s45
      %s39 = sphi 0, %s37
      %s40 = sphi 0, %s38
      %s41 = sphi 0, %s39
      %s42 = sphi 0, %s40
      %s50 = sphi 0, %s50
      %s52 = sphi 0, %s50
      %s53 = sphi 0, %s52
      %s67 = sphi 0, %s53
      %s71 = sphi 0, %s71
      %s73 = sphi 0, %s71
      %s74 = sphi 0, %s73
      %s88 = sphi 0, %s74
      %s94 = sphi 0, %s96
      %s97 = sphi 0, %s94
      %s98 = sphi 0, %s97
      %s114 = sphi 0, %s98
      %s120 = sphi 0, %s122
      %s123 = sphi 0, %s120
      %s124 = sphi 0, %s123
      %s140 = sphi 0, %s124
      %s146 = sphi 0, %s148
      %s149 = sphi 0, %s146
      %s150 = sphi 0, %s149
      %s166 = sphi 0, %s150
      %s172 = sphi 0, %s174
      %s175 = sphi 0, %s172
      %s176 = sphi 0, %s175
      %s192 = sphi 0, %s176
      %s198 = sphi 0, %s200
      %s201 = sphi 0, %s198
      %s202 = sphi 0, %s201
      %s218 = sphi 0, %s202
      %s224 = sphi 0, %s226
      %s227 = sphi 0, %s224
      %s228 = sphi 0, %s227
      %s244 = sphi 0, %s228
      %s250 = sphi 0, %s252
      %s253 = sphi 0, %s250
      %s254 = sphi 0, %s253
      %s270 = sphi 0, %s254
      %s276 = sphi 0, %s278
      %s279 = sphi 0, %s276
      %s280 = sphi 0, %s279
      %s296 = sphi 0, %s280
      %s302 = sphi 0, %s304
      %s305 = sphi 0, %s302
      %s306 = sphi 0, %s305
      %s322 = sphi 0, %s306
      %s328 = sphi 0, %s330
      %s331 = sphi 0, %s328
      %s332 = sphi 0, %s331
      %s348 = sphi 0, %s332
      %s354 = sphi 0, %s356
      %s357 = sphi 0, %s354
      %s358 = sphi 0, %s357
      %s374 = sphi 0, %s358
      %s380 = sphi 0, %s382
      %s383 = sphi 0, %s380
      %s384 = sphi 0, %s383
      %s400 = sphi 0, %s384
      %s406 = sphi 0, %s408
      %s409 = sphi 0, %s406
      %s410 = sphi 0, %s409
      %s426 = sphi 0, %s410
    $region4: #{tpu_custom_call.1} parent=1 // loop_header_branch
      %33 = sbr.rel (%p31) target = $region8
    $region5: #{tpu_custom_call.1} parent=1 // loop_body
      %s35 = ssub.s32 %s30, 1
      %s36 = ssub.s32 %s30, 2
      %s43 = sadd.s32 1, %s38
      %p44 = scmp.ge.s32.totalorder %s43, 2
      %s45 = scalar_select %p44, 0, %s43
      %s46 = sadd.s32 1, %s37
      %s47 = scalar_select %p44, %s46, %s37
      %p48 = scmp.ge.s32.totalorder %s47, 2
      %s49 = scalar_select %p48, 0, %s47
      %s51 = sadd.s32 %s50, 1
      %p54 = scmp.eq.s32.totalorder %s30, 3
      %p55 = scmp.ne.s32.totalorder %s50, %s52
      %p56 = scmp.eq.s32.totalorder %s30, 0
      %p57 = por %p55, %p56
      %p58 = scmp.ne.s32.totalorder %s50, %s52
      %p59 = scmp.eq.s32.totalorder %s35, 3
      %p60 = por %p58, %p59
      %p61 = scmp.ne.s32.totalorder %s52, %s53
      %p62 = scmp.eq.s32.totalorder %s35, 0
      %p63 = por %p61, %p62
      %p64 = scmp.ne.s32.totalorder %s52, %s53
      %p65 = scmp.eq.s32.totalorder %s36, 3
      %p66 = por %p64, %p65
      %p68 = scmp.ne.s32.totalorder %s53, %s67
      %p69 = scmp.eq.s32.totalorder %s36, 0
      %p70 = por %p68, %p69
      %s72 = sadd.s32 %s71, 1
      %p75 = scmp.eq.s32.totalorder %s30, 3
      %p76 = scmp.ne.s32.totalorder %s71, %s73
      %p77 = scmp.eq.s32.totalorder %s30, 0
      %p78 = por %p76, %p77
      %p79 = scmp.ne.s32.totalorder %s71, %s73
      %p80 = scmp.eq.s32.totalorder %s35, 3
      %p81 = por %p79, %p80
      %p82 = scmp.ne.s32.totalorder %s73, %s74
      %p83 = scmp.eq.s32.totalorder %s35, 0
      %p84 = por %p82, %p83
      %p85 = scmp.ne.s32.totalorder %s73, %s74
      %p86 = scmp.eq.s32.totalorder %s36, 3
      %p87 = por %p85, %p86
      %p89 = scmp.ne.s32.totalorder %s74, %s88
      %p90 = scmp.eq.s32.totalorder %s36, 0
      %p91 = por %p89, %p90
      %s92 = ssub.s32 %s38, %s45
      %p93 = scmp.eq.s32.totalorder %s92, 0
      %s95 = sadd.s32 %s94, 1
      %s96 = scalar_select %p93, %s94, %s95
      %p99 = pneg %p93
      %p100 = scmp.eq.s32.totalorder %s30, 3
      %p101 = por %p99, %p100
      %p102 = scmp.ne.s32.totalorder %s94, %s97
      %p103 = scmp.eq.s32.totalorder %s30, 0
      %p104 = por %p102, %p103
      %p105 = scmp.ne.s32.totalorder %s94, %s97
      %p106 = scmp.eq.s32.totalorder %s35, 3
      %p107 = por %p105, %p106
      %p108 = scmp.ne.s32.totalorder %s97, %s98
      %p109 = scmp.eq.s32.totalorder %s35, 0
      %p110 = por %p108, %p109
      %p111 = scmp.ne.s32.totalorder %s97, %s98
      %p112 = scmp.eq.s32.totalorder %s36, 3
      %p113 = por %p111, %p112
      %p115 = scmp.ne.s32.totalorder %s98, %s114
      %p116 = scmp.eq.s32.totalorder %s36, 0
      %p117 = por %p115, %p116
      %s118 = ssub.s32 %s38, %s45
      %p119 = scmp.eq.s32.totalorder %s118, 0
      %s121 = sadd.s32 %s120, 1
      %s122 = scalar_select %p119, %s120, %s121
      %p125 = pneg %p119
      %p126 = scmp.eq.s32.totalorder %s30, 3
      %p127 = por %p125, %p126
      %p128 = scmp.ne.s32.totalorder %s120, %s123
      %p129 = scmp.eq.s32.totalorder %s30, 0
      %p130 = por %p128, %p129
      %p131 = scmp.ne.s32.totalorder %s120, %s123
      %p132 = scmp.eq.s32.totalorder %s35, 3
      %p133 = por %p131, %p132
      %p134 = scmp.ne.s32.totalorder %s123, %s124
      %p135 = scmp.eq.s32.totalorder %s35, 0
      %p136 = por %p134, %p135
      %p137 = scmp.ne.s32.totalorder %s123, %s124
      %p138 = scmp.eq.s32.totalorder %s36, 3
      %p139 = por %p137, %p138
      %p141 = scmp.ne.s32.totalorder %s124, %s140
      %p142 = scmp.eq.s32.totalorder %s36, 0
      %p143 = por %p141, %p142
      %s144 = ssub.s32 %s38, %s45
      %p145 = scmp.eq.s32.totalorder %s144, 0
      %s147 = sadd.s32 %s146, 1
      %s148 = scalar_select %p145, %s146, %s147
      %p151 = pneg %p145
      %p152 = scmp.eq.s32.totalorder %s30, 3
      %p153 = por %p151, %p152
      %p154 = scmp.ne.s32.totalorder %s146, %s149
      %p155 = scmp.eq.s32.totalorder %s30, 0
      %p156 = por %p154, %p155
      %p157 = scmp.ne.s32.totalorder %s146, %s149
      %p158 = scmp.eq.s32.totalorder %s35, 3
      %p159 = por %p157, %p158
      %p160 = scmp.ne.s32.totalorder %s149, %s150
      %p161 = scmp.eq.s32.totalorder %s35, 0
      %p162 = por %p160, %p161
      %p163 = scmp.ne.s32.totalorder %s149, %s150
      %p164 = scmp.eq.s32.totalorder %s36, 3
      %p165 = por %p163, %p164
      %p167 = scmp.ne.s32.totalorder %s150, %s166
      %p168 = scmp.eq.s32.totalorder %s36, 0
      %p169 = por %p167, %p168
      %s170 = ssub.s32 %s38, %s45
      %p171 = scmp.eq.s32.totalorder %s170, 0
      %s173 = sadd.s32 %s172, 1
      %s174 = scalar_select %p171, %s172, %s173
      %p177 = pneg %p171
      %p178 = scmp.eq.s32.totalorder %s30, 3
      %p179 = por %p177, %p178
      %p180 = scmp.ne.s32.totalorder %s172, %s175
      %p181 = scmp.eq.s32.totalorder %s30, 0
      %p182 = por %p180, %p181
      %p183 = scmp.ne.s32.totalorder %s172, %s175
      %p184 = scmp.eq.s32.totalorder %s35, 3
      %p185 = por %p183, %p184
      %p186 = scmp.ne.s32.totalorder %s175, %s176
      %p187 = scmp.eq.s32.totalorder %s35, 0
      %p188 = por %p186, %p187
      %p189 = scmp.ne.s32.totalorder %s175, %s176
      %p190 = scmp.eq.s32.totalorder %s36, 3
      %p191 = por %p189, %p190
      %p193 = scmp.ne.s32.totalorder %s176, %s192
      %p194 = scmp.eq.s32.totalorder %s36, 0
      %p195 = por %p193, %p194
      %s196 = ssub.s32 %s38, %s45
      %p197 = scmp.eq.s32.totalorder %s196, 0
      %s199 = sadd.s32 %s198, 1
      %s200 = scalar_select %p197, %s198, %s199
      %p203 = pneg %p197
      %p204 = scmp.eq.s32.totalorder %s30, 3
      %p205 = por %p203, %p204
      %p206 = scmp.ne.s32.totalorder %s198, %s201
      %p207 = scmp.eq.s32.totalorder %s30, 0
      %p208 = por %p206, %p207
      %p209 = scmp.ne.s32.totalorder %s198, %s201
      %p210 = scmp.eq.s32.totalorder %s35, 3
      %p211 = por %p209, %p210
      %p212 = scmp.ne.s32.totalorder %s201, %s202
      %p213 = scmp.eq.s32.totalorder %s35, 0
      %p214 = por %p212, %p213
      %p215 = scmp.ne.s32.totalorder %s201, %s202
      %p216 = scmp.eq.s32.totalorder %s36, 3
      %p217 = por %p215, %p216
      %p219 = scmp.ne.s32.totalorder %s202, %s218
      %p220 = scmp.eq.s32.totalorder %s36, 0
      %p221 = por %p219, %p220
      %s222 = ssub.s32 %s38, %s45
      %p223 = scmp.eq.s32.totalorder %s222, 0
      %s225 = sadd.s32 %s224, 1
      %s226 = scalar_select %p223, %s224, %s225
      %p229 = pneg %p223
      %p230 = scmp.eq.s32.totalorder %s30, 3
      %p231 = por %p229, %p230
      %p232 = scmp.ne.s32.totalorder %s224, %s227
      %p233 = scmp.eq.s32.totalorder %s30, 0
      %p234 = por %p232, %p233
      %p235 = scmp.ne.s32.totalorder %s224, %s227
      %p236 = scmp.eq.s32.totalorder %s35, 3
      %p237 = por %p235, %p236
      %p238 = scmp.ne.s32.totalorder %s227, %s228
      %p239 = scmp.eq.s32.totalorder %s35, 0
      %p240 = por %p238, %p239
      %p241 = scmp.ne.s32.totalorder %s227, %s228
      %p242 = scmp.eq.s32.totalorder %s36, 3
      %p243 = por %p241, %p242
      %p245 = scmp.ne.s32.totalorder %s228, %s244
      %p246 = scmp.eq.s32.totalorder %s36, 0
      %p247 = por %p245, %p246
      %s248 = ssub.s32 %s38, %s45
      %p249 = scmp.eq.s32.totalorder %s248, 0
      %s251 = sadd.s32 %s250, 1
      %s252 = scalar_select %p249, %s250, %s251
      %p255 = pneg %p249
      %p256 = scmp.eq.s32.totalorder %s30, 3
      %p257 = por %p255, %p256
      %p258 = scmp.ne.s32.totalorder %s250, %s253
      %p259 = scmp.eq.s32.totalorder %s30, 0
      %p260 = por %p258, %p259
      %p261 = scmp.ne.s32.totalorder %s250, %s253
      %p262 = scmp.eq.s32.totalorder %s35, 3
      %p263 = por %p261, %p262
      %p264 = scmp.ne.s32.totalorder %s253, %s254
      %p265 = scmp.eq.s32.totalorder %s35, 0
      %p266 = por %p264, %p265
      %p267 = scmp.ne.s32.totalorder %s253, %s254
      %p268 = scmp.eq.s32.totalorder %s36, 3
      %p269 = por %p267, %p268
      %p271 = scmp.ne.s32.totalorder %s254, %s270
      %p272 = scmp.eq.s32.totalorder %s36, 0
      %p273 = por %p271, %p272
      %s274 = ssub.s32 %s38, %s45
      %p275 = scmp.eq.s32.totalorder %s274, 0
      %s277 = sadd.s32 %s276, 1
      %s278 = scalar_select %p275, %s276, %s277
      %p281 = pneg %p275
      %p282 = scmp.eq.s32.totalorder %s30, 3
      %p283 = por %p281, %p282
      %p284 = scmp.ne.s32.totalorder %s276, %s279
      %p285 = scmp.eq.s32.totalorder %s30, 0
      %p286 = por %p284, %p285
      %p287 = scmp.ne.s32.totalorder %s276, %s279
      %p288 = scmp.eq.s32.totalorder %s35, 3
      %p289 = por %p287, %p288
      %p290 = scmp.ne.s32.totalorder %s279, %s280
      %p291 = scmp.eq.s32.totalorder %s35, 0
      %p292 = por %p290, %p291
      %p293 = scmp.ne.s32.totalorder %s279, %s280
      %p294 = scmp.eq.s32.totalorder %s36, 3
      %p295 = por %p293, %p294
      %p297 = scmp.ne.s32.totalorder %s280, %s296
      %p298 = scmp.eq.s32.totalorder %s36, 0
      %p299 = por %p297, %p298
      %s300 = ssub.s32 %s38, %s45
      %p301 = scmp.eq.s32.totalorder %s300, 0
      %s303 = sadd.s32 %s302, 1
      %s304 = scalar_select %p301, %s302, %s303
      %p307 = pneg %p301
      %p308 = scmp.eq.s32.totalorder %s30, 3
      %p309 = por %p307, %p308
      %p310 = scmp.ne.s32.totalorder %s302, %s305
      %p311 = scmp.eq.s32.totalorder %s30, 0
      %p312 = por %p310, %p311
      %p313 = scmp.ne.s32.totalorder %s302, %s305
      %p314 = scmp.eq.s32.totalorder %s35, 3
      %p315 = por %p313, %p314
      %p316 = scmp.ne.s32.totalorder %s305, %s306
      %p317 = scmp.eq.s32.totalorder %s35, 0
      %p318 = por %p316, %p317
      %p319 = scmp.ne.s32.totalorder %s305, %s306
      %p320 = scmp.eq.s32.totalorder %s36, 3
      %p321 = por %p319, %p320
      %p323 = scmp.ne.s32.totalorder %s306, %s322
      %p324 = scmp.eq.s32.totalorder %s36, 0
      %p325 = por %p323, %p324
      %s326 = ssub.s32 %s38, %s45
      %p327 = scmp.eq.s32.totalorder %s326, 0
      %s329 = sadd.s32 %s328, 1
      %s330 = scalar_select %p327, %s328, %s329
      %p333 = pneg %p327
      %p334 = scmp.eq.s32.totalorder %s30, 3
      %p335 = por %p333, %p334
      %p336 = scmp.ne.s32.totalorder %s328, %s331
      %p337 = scmp.eq.s32.totalorder %s30, 0
      %p338 = por %p336, %p337
      %p339 = scmp.ne.s32.totalorder %s328, %s331
      %p340 = scmp.eq.s32.totalorder %s35, 3
      %p341 = por %p339, %p340
      %p342 = scmp.ne.s32.totalorder %s331, %s332
      %p343 = scmp.eq.s32.totalorder %s35, 0
      %p344 = por %p342, %p343
      %p345 = scmp.ne.s32.totalorder %s331, %s332
      %p346 = scmp.eq.s32.totalorder %s36, 3
      %p347 = por %p345, %p346
      %p349 = scmp.ne.s32.totalorder %s332, %s348
      %p350 = scmp.eq.s32.totalorder %s36, 0
      %p351 = por %p349, %p350
      %s352 = ssub.s32 %s38, %s45
      %p353 = scmp.eq.s32.totalorder %s352, 0
      %s355 = sadd.s32 %s354, 1
      %s356 = scalar_select %p353, %s354, %s355
      %p359 = pneg %p353
      %p360 = scmp.eq.s32.totalorder %s30, 3
      %p361 = por %p359, %p360
      %p362 = scmp.ne.s32.totalorder %s354, %s357
      %p363 = scmp.eq.s32.totalorder %s30, 0
      %p364 = por %p362, %p363
      %p365 = scmp.ne.s32.totalorder %s354, %s357
      %p366 = scmp.eq.s32.totalorder %s35, 3
      %p367 = por %p365, %p366
      %p368 = scmp.ne.s32.totalorder %s357, %s358
      %p369 = scmp.eq.s32.totalorder %s35, 0
      %p370 = por %p368, %p369
      %p371 = scmp.ne.s32.totalorder %s357, %s358
      %p372 = scmp.eq.s32.totalorder %s36, 3
      %p373 = por %p371, %p372
      %p375 = scmp.ne.s32.totalorder %s358, %s374
      %p376 = scmp.eq.s32.totalorder %s36, 0
      %p377 = por %p375, %p376
      %s378 = ssub.s32 %s38, %s45
      %p379 = scmp.eq.s32.totalorder %s378, 0
      %s381 = sadd.s32 %s380, 1
      %s382 = scalar_select %p379, %s380, %s381
      %p385 = pneg %p379
      %p386 = scmp.eq.s32.totalorder %s30, 3
      %p387 = por %p385, %p386
      %p388 = scmp.ne.s32.totalorder %s380, %s383
      %p389 = scmp.eq.s32.totalorder %s30, 0
      %p390 = por %p388, %p389
      %p391 = scmp.ne.s32.totalorder %s380, %s383
      %p392 = scmp.eq.s32.totalorder %s35, 3
      %p393 = por %p391, %p392
      %p394 = scmp.ne.s32.totalorder %s383, %s384
      %p395 = scmp.eq.s32.totalorder %s35, 0
      %p396 = por %p394, %p395
      %p397 = scmp.ne.s32.totalorder %s383, %s384
      %p398 = scmp.eq.s32.totalorder %s36, 3
      %p399 = por %p397, %p398
      %p401 = scmp.ne.s32.totalorder %s384, %s400
      %p402 = scmp.eq.s32.totalorder %s36, 0
      %p403 = por %p401, %p402
      %s404 = ssub.s32 %s37, %s49
      %p405 = scmp.eq.s32.totalorder %s404, 0
      %s407 = sadd.s32 %s406, 1
      %s408 = scalar_select %p405, %s406, %s407
      %p411 = pneg %p405
      %p412 = scmp.eq.s32.totalorder %s30, 3
      %p413 = por %p411, %p412
      %p414 = scmp.ne.s32.totalorder %s406, %s409
      %p415 = scmp.eq.s32.totalorder %s30, 0
      %p416 = por %p414, %p415
      %p417 = scmp.ne.s32.totalorder %s406, %s409
      %p418 = scmp.eq.s32.totalorder %s35, 3
      %p419 = por %p417, %p418
      %p420 = scmp.ne.s32.totalorder %s409, %s410
      %p421 = scmp.eq.s32.totalorder %s35, 0
      %p422 = por %p420, %p421
      %p423 = scmp.ne.s32.totalorder %s409, %s410
      %p424 = scmp.eq.s32.totalorder %s36, 3
      %p425 = por %p423, %p424
      %p427 = scmp.ne.s32.totalorder %s410, %s426
      %p428 = scmp.eq.s32.totalorder %s36, 0
      %p429 = por %p427, %p428
      %p430 = scmp.le.s32.totalorder 1, %s30
      %p431 = scmp.lt.s32.totalorder %s30, 5
      %p432 = pnand %p430, %p431
      %p433 = pneg %p432
      // Predicated region
      $region9: #{tpu_custom_call.1} parent=5 // pred_check
        _
      $region10: #{tpu_custom_call.1} parent=5 // pred_check_branch
        %435 = sbr.rel (%p432) target = $region12
      $region11: #{tpu_custom_call.1} parent=5 // pred_region
        %s436 = ssub.s32 %s30, 1
        // Predicated region
        $region13: #{tpu_custom_call.1} parent=11 // pred_check
          %p437 = pneg %p63
        $region14: #{tpu_custom_call.1} parent=11 // pred_check_branch
          %439 = sbr.rel (%p437) target = $region16
        $region15: #{tpu_custom_call.1} parent=11 // pred_region
          _
        $region16: #{tpu_custom_call.1} parent=11 // pred_fallthru
          _
        // Predicated region
        $region17: #{tpu_custom_call.1} parent=11 // pred_check
          %p440 = pneg %p84
        $region18: #{tpu_custom_call.1} parent=11 // pred_check_branch
          %442 = sbr.rel (%p440) target = $region20
        $region19: #{tpu_custom_call.1} parent=11 // pred_region
          _
        $region20: #{tpu_custom_call.1} parent=11 // pred_fallthru
          _
      $region12: #{tpu_custom_call.1} parent=5 // pred_fallthru
        _
      %p443 = scmp.lt.s32.totalorder %s30, 4
      // Predicated region
      $region21: #{tpu_custom_call.1} parent=5 // pred_check
        %p444 = pneg %p443
      $region22: #{tpu_custom_call.1} parent=5 // pred_check_branch
        %446 = sbr.rel (%p444) target = $region24
      $region23: #{tpu_custom_call.1} parent=5 // pred_region
        // Predicated region
        $region25: #{tpu_custom_call.1} parent=23 // pred_check
          %p447 = pneg %p104
        $region26: #{tpu_custom_call.1} parent=23 // pred_check_branch
          %449 = sbr.rel (%p447) target = $region28
        $region27: #{tpu_custom_call.1} parent=23 // pred_region
          %p450 = scmp.lt.s32.totalorder %s38, 1
          %s451 = scalar_select %p450, %s38, 1
          %s452 = smul.addr %s451, 4
          %s453 = smul.addr %s452, 8
          %s454 = scalar_lea.vmem %s3, %s453
        $region28: #{tpu_custom_call.1} parent=23 // pred_fallthru
          _
        // Predicated region
        $region29: #{tpu_custom_call.1} parent=23 // pred_check
          %p455 = pneg %p130
        $region30: #{tpu_custom_call.1} parent=23 // pred_check_branch
          %457 = sbr.rel (%p455) target = $region32
        $region31: #{tpu_custom_call.1} parent=23 // pred_region
          %p458 = scmp.lt.s32.totalorder %s38, 1
          %s459 = scalar_select %p458, %s38, 1
          %s460 = scalar_lea.vmem %s4, %s459
        $region32: #{tpu_custom_call.1} parent=23 // pred_fallthru
          _
        // Predicated region
        $region33: #{tpu_custom_call.1} parent=23 // pred_check
          %p461 = pneg %p156
        $region34: #{tpu_custom_call.1} parent=23 // pred_check_branch
          %463 = sbr.rel (%p461) target = $region36
        $region35: #{tpu_custom_call.1} parent=23 // pred_region
          %p464 = scmp.lt.s32.totalorder %s38, 1
          %s465 = scalar_select %p464, %s38, 1
          %s466 = smul.addr %s465, 4
          %s467 = smul.addr %s466, 8
          %s468 = scalar_lea.vmem %s5, %s467
        $region36: #{tpu_custom_call.1} parent=23 // pred_fallthru
          _
        // Predicated region
        $region37: #{tpu_custom_call.1} parent=23 // pred_check
          %p469 = pneg %p182
        $region38: #{tpu_custom_call.1} parent=23 // pred_check_branch
          %471 = sbr.rel (%p469) target = $region40
        $region39: #{tpu_custom_call.1} parent=23 // pred_region
          %p472 = scmp.lt.s32.totalorder %s38, 1
          %s473 = scalar_select %p472, %s38, 1
          %s474 = scalar_lea.vmem %s6, %s473
        $region40: #{tpu_custom_call.1} parent=23 // pred_fallthru
          _
        // Predicated region
        $region41: #{tpu_custom_call.1} parent=23 // pred_check
          %p475 = pneg %p208
        $region42: #{tpu_custom_call.1} parent=23 // pred_check_branch
          %477 = sbr.rel (%p475) target = $region44
        $region43: #{tpu_custom_call.1} parent=23 // pred_region
          %p478 = scmp.lt.s32.totalorder %s38, 1
          %s479 = scalar_select %p478, %s38, 1
          %s480 = scalar_lea.vmem %s7, %s479
        $region44: #{tpu_custom_call.1} parent=23 // pred_fallthru
          _
        // Predicated region
        $region45: #{tpu_custom_call.1} parent=23 // pred_check
          %p481 = pneg %p234
        $region46: #{tpu_custom_call.1} parent=23 // pred_check_branch
          %483 = sbr.rel (%p481) target = $region48
        $region47: #{tpu_custom_call.1} parent=23 // pred_region
          %p484 = scmp.lt.s32.totalorder %s38, 1
          %s485 = scalar_select %p484, %s38, 1
          %s486 = scalar_lea.vmem %s8, %s485
        $region48: #{tpu_custom_call.1} parent=23 // pred_fallthru
          _
        // Predicated region
        $region49: #{tpu_custom_call.1} parent=23 // pred_check
          %p487 = pneg %p260
        $region50: #{tpu_custom_call.1} parent=23 // pred_check_branch
          %489 = sbr.rel (%p487) target = $region52
        $region51: #{tpu_custom_call.1} parent=23 // pred_region
          %p490 = scmp.lt.s32.totalorder %s38, 1
          %s491 = scalar_select %p490, %s38, 1
          %s492 = smul.addr %s491, 4
          %s493 = smul.addr %s492, 8
          %s494 = scalar_lea.vmem %s9, %s493
        $region52: #{tpu_custom_call.1} parent=23 // pred_fallthru
          _
        // Predicated region
        $region53: #{tpu_custom_call.1} parent=23 // pred_check
          %p495 = pneg %p286
        $region54: #{tpu_custom_call.1} parent=23 // pred_check_branch
          %497 = sbr.rel (%p495) target = $region56
        $region55: #{tpu_custom_call.1} parent=23 // pred_region
          %p498 = scmp.lt.s32.totalorder %s38, 1
          %s499 = scalar_select %p498, %s38, 1
          %s500 = scalar_lea.vmem %s10, %s499
        $region56: #{tpu_custom_call.1} parent=23 // pred_fallthru
          _
        // Predicated region
        $region57: #{tpu_custom_call.1} parent=23 // pred_check
          %p501 = pneg %p312
        $region58: #{tpu_custom_call.1} parent=23 // pred_check_branch
          %503 = sbr.rel (%p501) target = $region60
        $region59: #{tpu_custom_call.1} parent=23 // pred_region
          %p504 = scmp.lt.s32.totalorder %s38, 1
          %s505 = scalar_select %p504, %s38, 1
          %s506 = smul.addr %s505, 8
          %s507 = smul.addr %s506, 8
          %s508 = scalar_lea.vmem %s11, %s507
        $region60: #{tpu_custom_call.1} parent=23 // pred_fallthru
          _
        // Predicated region
        $region61: #{tpu_custom_call.1} parent=23 // pred_check
          %p509 = pneg %p338
        $region62: #{tpu_custom_call.1} parent=23 // pred_check_branch
          %511 = sbr.rel (%p509) target = $region64
        $region63: #{tpu_custom_call.1} parent=23 // pred_region
          %p512 = scmp.lt.s32.totalorder %s38, 1
          %s513 = scalar_select %p512, %s38, 1
          %s514 = scalar_lea.vmem %s12, %s513
        $region64: #{tpu_custom_call.1} parent=23 // pred_fallthru
          _
        // Predicated region
        $region65: #{tpu_custom_call.1} parent=23 // pred_check
          %p515 = pneg %p364
        $region66: #{tpu_custom_call.1} parent=23 // pred_check_branch
          %517 = sbr.rel (%p515) target = $region68
        $region67: #{tpu_custom_call.1} parent=23 // pred_region
          %p518 = scmp.lt.s32.totalorder %s38, 1
          %s519 = scalar_select %p518, %s38, 1
          %s520 = scalar_lea.vmem %s13, %s519
        $region68: #{tpu_custom_call.1} parent=23 // pred_fallthru
          _
        // Predicated region
        $region69: #{tpu_custom_call.1} parent=23 // pred_check
          %p521 = pneg %p390
        $region70: #{tpu_custom_call.1} parent=23 // pred_check_branch
          %523 = sbr.rel (%p521) target = $region72
        $region71: #{tpu_custom_call.1} parent=23 // pred_region
          %p524 = scmp.lt.s32.totalorder %s38, 1
          %s525 = scalar_select %p524, %s38, 1
          %s526 = scalar_lea.vmem %s14, %s525
        $region72: #{tpu_custom_call.1} parent=23 // pred_fallthru
          _
      $region24: #{tpu_custom_call.1} parent=5 // pred_fallthru
        _
      %p527 = scmp.le.s32.totalorder 1, %s30
      %p528 = scmp.lt.s32.totalorder %s30, 5
      %p529 = pnand %p527, %p528
      %p530 = pneg %p529
      // Predicated region
      $region73: #{tpu_custom_call.1} parent=5 // pred_check
        _
      $region74: #{tpu_custom_call.1} parent=5 // pred_check_branch
        %532 = sbr.rel (%p529) target = $region76
      $region75: #{tpu_custom_call.1} parent=5 // pred_region
        %s533 = ssub.s32 %s30, 1
        %p534 = pneg %p63
        %p535 = pneg %p60
        %p536 = pneg %p84
        %p537 = pneg %p81
        %p538 = scmp.lt.s32.totalorder %s40, 1
        %s539 = scalar_select %p538, %s40, 1
        %s540 = smul.addr %s539, 4
        %s541 = smul.addr %s540, 8
        %s542 = scalar_lea.vmem %s3, %s541
        %p543 = pneg %p110
        %p544 = pneg %p107
        %p545 = scmp.lt.s32.totalorder %s40, 1
        %s546 = scalar_select %p545, %s40, 1
        %s547 = scalar_lea.vmem %s4, %s546
        %p548 = pneg %p136
        %p549 = pneg %p133
        %p550 = scmp.lt.s32.totalorder %s40, 1
        %s551 = scalar_select %p550, %s40, 1
        %s552 = smul.addr %s551, 4
        %s553 = smul.addr %s552, 8
        %s554 = scalar_lea.vmem %s5, %s553
        %p555 = pneg %p162
        %p556 = pneg %p159
        %p557 = scmp.lt.s32.totalorder %s40, 1
        %s558 = scalar_select %p557, %s40, 1
        %s559 = scalar_lea.vmem %s6, %s558
        %p560 = pneg %p188
        %p561 = pneg %p185
        %p562 = scmp.lt.s32.totalorder %s40, 1
        %s563 = scalar_select %p562, %s40, 1
        %s564 = scalar_lea.vmem %s7, %s563
        %p565 = pneg %p214
        %p566 = pneg %p211
        %p567 = scmp.lt.s32.totalorder %s40, 1
        %s568 = scalar_select %p567, %s40, 1
        %s569 = scalar_lea.vmem %s8, %s568
        %p570 = pneg %p240
        %p571 = pneg %p237
        %p572 = scmp.lt.s32.totalorder %s40, 1
        %s573 = scalar_select %p572, %s40, 1
        %s574 = smul.addr %s573, 4
        %s575 = smul.addr %s574, 8
        %s576 = scalar_lea.vmem %s9, %s575
        %p577 = pneg %p266
        %p578 = pneg %p263
        %p579 = scmp.lt.s32.totalorder %s40, 1
        %s580 = scalar_select %p579, %s40, 1
        %s581 = scalar_lea.vmem %s10, %s580
        %p582 = pneg %p292
        %p583 = pneg %p289
        %p584 = scmp.lt.s32.totalorder %s40, 1
        %s585 = scalar_select %p584, %s40, 1
        %s586 = smul.addr %s585, 8
        %s587 = smul.addr %s586, 8
        %s588 = scalar_lea.vmem %s11, %s587
        %p589 = pneg %p318
        %p590 = pneg %p315
        %p591 = scmp.lt.s32.totalorder %s40, 1
        %s592 = scalar_select %p591, %s40, 1
        %s593 = scalar_lea.vmem %s12, %s592
        %p594 = pneg %p344
        %p595 = pneg %p341
        %p596 = scmp.lt.s32.totalorder %s40, 1
        %s597 = scalar_select %p596, %s40, 1
        %s598 = scalar_lea.vmem %s13, %s597
        %p599 = pneg %p370
        %p600 = pneg %p367
        %p601 = scmp.lt.s32.totalorder %s40, 1
        %s602 = scalar_select %p601, %s40, 1
        %s603 = scalar_lea.vmem %s14, %s602
        %p604 = pneg %p396
        %p605 = pneg %p393
        %p606 = pneg %p422
        %p607 = pneg %p419
        %s608 = sand.u32 %s409, 1
        %s609 = scalar_lea.sflag [#allocation6], %s608
        %s610 = sand.u32 %s409, 1
        %s611 = smul.addr %s610, 8
        %s612 = scalar_lea.vmem [#allocation5], %s611
        %p613 = scmp.lt.s32.totalorder %s40, 1
        %s614 = scalar_select %p613, %s40, 1
        %s615 = smul.addr %s614, 4
        %s616 = smul.addr %s615, 8
        %s617 = scalar_lea.vmem %s3, %s616
        %p618 = scmp.lt.s32.totalorder %s40, 1
        %s619 = scalar_select %p618, %s40, 1
        %s620 = scalar_lea.vmem %s4, %s619
        %p621 = scmp.lt.s32.totalorder %s40, 1
        %s622 = scalar_select %p621, %s40, 1
        %s623 = smul.addr %s622, 4
        %s624 = smul.addr %s623, 8
        %s625 = scalar_lea.vmem %s5, %s624
        %p626 = scmp.lt.s32.totalorder %s40, 1
        %s627 = scalar_select %p626, %s40, 1
        %s628 = scalar_lea.vmem %s6, %s627
        %p629 = scmp.lt.s32.totalorder %s40, 1
        %s630 = scalar_select %p629, %s40, 1
        %s631 = scalar_lea.vmem %s7, %s630
        %p632 = scmp.lt.s32.totalorder %s40, 1
        %s633 = scalar_select %p632, %s40, 1
        %s634 = scalar_lea.vmem %s8, %s633
        %p635 = scmp.lt.s32.totalorder %s40, 1
        %s636 = scalar_select %p635, %s40, 1
        %s637 = smul.addr %s636, 4
        %s638 = smul.addr %s637, 8
        %s639 = scalar_lea.vmem %s9, %s638
        %p640 = scmp.lt.s32.totalorder %s40, 1
        %s641 = scalar_select %p640, %s40, 1
        %s642 = scalar_lea.vmem %s10, %s641
        %p643 = scmp.lt.s32.totalorder %s40, 1
        %s644 = scalar_select %p643, %s40, 1
        %s645 = smul.addr %s644, 8
        %s646 = smul.addr %s645, 8
        %s647 = scalar_lea.vmem %s11, %s646
        %p648 = scmp.lt.s32.totalorder %s40, 1
        %s649 = scalar_select %p648, %s40, 1
        %s650 = scalar_lea.vmem %s12, %s649
        %p651 = scmp.lt.s32.totalorder %s40, 1
        %s652 = scalar_select %p651, %s40, 1
        %s653 = scalar_lea.vmem %s13, %s652
        %p654 = scmp.lt.s32.totalorder %s40, 1
        %s655 = scalar_select %p654, %s40, 1
        %s656 = scalar_lea.vmem %s14, %s655
        %p657 = scmp.eq.s32.totalorder %s40, 0
        // Predicated region
        $region77: #{tpu_custom_call.1} parent=75 // pred_check
          %p658 = pneg %p657
        $region78: #{tpu_custom_call.1} parent=75 // pred_check_branch
          %660 = sbr.rel (%p658) target = $region80
        $region79: #{tpu_custom_call.1} parent=75 // pred_region
          %s661 = smul.u32 %s39, 128
          %s662 = sld [smem:[#allocation4 + %s661]]
          %s663 = scalar_lea.vmem %s1, %s662
          %v664 = vld [vmem:[%s663] sm:$0x1]
          %v665 = vld [vmem:[%s2] sm:$0x1]
          %v666 = vadd.f32 %v664, %v665
          %vm667 = vcmask 253952
          %668 = vst.msk [vmem:[%s612] sm:$0x1] %vm667, %v666
          %s669 = sadd.s32 %s661, 1
          %s670 = sld [smem:[#allocation4 + %s669]]
          %s671 = scalar_lea.vmem %s1, %s670
          %v672 = vld [vmem:[%s671] sm:$0x1]
          %v673 = vld [vmem:[%s2 + $0x1] sm:$0x1]
          %v674 = vadd.f32 %v672, %v673
          %675 = vst.msk [vmem:[%s612 + $0x1] sm:$0x1] %vm667, %v674
          %s676 = sadd.s32 %s661, 2
          %s677 = sld [smem:[#allocation4 + %s676]]
          %s678 = scalar_lea.vmem %s1, %s677
          %v679 = vld [vmem:[%s678] sm:$0x1]
          %v680 = vld [vmem:[%s2 + $0x2] sm:$0x1]
          %v681 = vadd.f32 %v679, %v680
          %682 = vst.msk [vmem:[%s612 + $0x2] sm:$0x1] %vm667, %v681
          %s683 = sadd.s32 %s661, 3
          %s684 = sld [smem:[#allocation4 + %s683]]
          %s685 = scalar_lea.vmem %s1, %s684
          %v686 = vld [vmem:[%s685] sm:$0x1]
          %v687 = vld [vmem:[%s2 + $0x3] sm:$0x1]
          %v688 = vadd.f32 %v686, %v687
          %689 = vst.msk [vmem:[%s612 + $0x3] sm:$0x1] %vm667, %v688
          %s690 = sadd.s32 %s661, 4
          %s691 = sld [smem:[#allocation4 + %s690]]
          %s692 = scalar_lea.vmem %s1, %s691
          %v693 = vld [vmem:[%s692] sm:$0x1]
          %v694 = vld [vmem:[%s2 + $0x4] sm:$0x1]
          %v695 = vadd.f32 %v693, %v694
          %696 = vst.msk [vmem:[%s612 + $0x4] sm:$0x1] %vm667, %v695
          %s697 = sadd.s32 %s661, 5
          %s698 = sld [smem:[#allocation4 + %s697]]
          %s699 = scalar_lea.vmem %s1, %s698
          %v700 = vld [vmem:[%s699] sm:$0x1]
          %v701 = vld [vmem:[%s2 + $0x5] sm:$0x1]
          %v702 = vadd.f32 %v700, %v701
          %703 = vst.msk [vmem:[%s612 + $0x5] sm:$0x1] %vm667, %v702
          %s704 = sadd.s32 %s661, 6
          %s705 = sld [smem:[#allocation4 + %s704]]
          %s706 = scalar_lea.vmem %s1, %s705
          %v707 = vld [vmem:[%s706] sm:$0x1]
          %v708 = vld [vmem:[%s2 + $0x6] sm:$0x1]
          %v709 = vadd.f32 %v707, %v708
          %710 = vst.msk [vmem:[%s612 + $0x6] sm:$0x1] %vm667, %v709
          %s711 = sadd.s32 %s661, 7
          %s712 = sld [smem:[#allocation4 + %s711]]
          %s713 = scalar_lea.vmem %s1, %s712
          %v714 = vld [vmem:[%s713] sm:$0x1]
          %v715 = vld [vmem:[%s2 + $0x7] sm:$0x1]
          %v716 = vadd.f32 %v714, %v715
          %717 = vst.msk [vmem:[%s612 + $0x7] sm:$0x1] %vm667, %v716
        $region80: #{tpu_custom_call.1} parent=75 // pred_fallthru
          _
        %v718 = vld [vmem:[%s612] sm:$0xff]
        %v719 = vld [vmem:[%s617] sm:$0xff]
        %v720 = vld [vmem:[%s617 + $0x8] sm:$0xff]
        %v721 = vld [vmem:[%s617 + $0x10] sm:$0xff]
        %v722 = vld [vmem:[%s617 + $0x18] sm:$0xff]
        %v723 = vld [vmem:[%s620] sm:$0x1]
        %v725 = vlaneseq
        %v726 = vshrl.u32 %v725, 7
        %v727 = vsub.s32 0, %v726
        %v728 = vrot.slane %v723, %v727
        %vm730 = vcmask 261120
        %v732 = vsel %vm730, %v718, 0
        %734 = vmatprep.subr.mxu0 0.0
        %735 = vmatpush1.msra.mxu0 0.0
        %736 = vmatprep.subr.mxu0 0.0
        %737 = vmatpush1.msra.mxu0 0.0
        %738 = vmatprep.subr.mxu0 0.0
        %739 = vmatpush1.msra.mxu0 0.0
        %740 = vmatprep.subr.mxu0 0.0
        %741 = vmatpush1.msra.mxu0 0.0
        %742 = vmatprep.subr.mxu0 0.0
        %743 = vmatpush1.msra.mxu0 0.0
        %744 = vmatprep.subr.mxu0 0.0
        %745 = vmatpush1.msra.mxu0 0.0
        %746 = vmatprep.subr.mxu0 0.0
        %747 = vmatpush1.msra.mxu0 0.0
        %748 = vmatprep.subr.mxu0 0.0
        %749 = vmatpush1.msra.mxu0 0.0
        %750 = vmatprep.subr.mxu0 0.0
        %751 = vmatpush1.msra.mxu0 0.0
        %752 = vmatprep.subr.mxu0 0.0
        %753 = vmatpush1.msra.mxu0 0.0
        %754 = vmatprep.subr.mxu0 0.0
        %755 = vmatpush1.msra.mxu0 0.0
        %756 = vmatprep.subr.mxu0 0.0
        %757 = vmatpush1.msra.mxu0 0.0
        %758 = vmatprep.subr.mxu0 0.0
        %759 = vmatpush1.msra.mxu0 %v722
        %760 = vmatprep.subr.mxu0 0.0
        %761 = vmatpush1.msra.mxu0 %v721
        %762 = vmatprep.subr.mxu0 0.0
        %763 = vmatpush1.msra.mxu0 %v720
        %764 = vmatprep.subr.mxu0 0.0
        %765 = vmatpush1.msra.mxu0 %v719
        %766 = vmatprep.subr.mxu0 0.0
        %767 = vmatpush2.msra.mxu0 0.0
        %768 = vmatprep.subr.mxu0 0.0
        %769 = vmatpush2.msra.mxu0 0.0
        %770 = vmatprep.subr.mxu0 0.0
        %771 = vmatpush2.msra.mxu0 0.0
        %772 = vmatprep.subr.mxu0 0.0
        %773 = vmatpush2.msra.mxu0 0.0
        %774 = vmatprep.subr.mxu0 0.0
        %775 = vmatpush2.msra.mxu0 0.0
        %776 = vmatprep.subr.mxu0 0.0
        %777 = vmatpush2.msra.mxu0 0.0
        %778 = vmatprep.subr.mxu0 0.0
        %779 = vmatpush2.msra.mxu0 0.0
        %780 = vmatprep.subr.mxu0 0.0
        %781 = vmatpush2.msra.mxu0 0.0
        %782 = vmatprep.subr.mxu0 0.0
        %783 = vmatpush2.msra.mxu0 0.0
        %784 = vmatprep.subr.mxu0 0.0
        %785 = vmatpush2.msra.mxu0 0.0
        %786 = vmatprep.subr.mxu0 0.0
        %787 = vmatpush2.msra.mxu0 0.0
        %788 = vmatprep.subr.mxu0 0.0
        %789 = vmatpush2.msra.mxu0 0.0
        %790 = vmatprep.subr.mxu0 0.0
        %791 = vmatpush2.msra.mxu0 0.0
        %792 = vmatprep.subr.mxu0 0.0
        %793 = vmatpush2.msra.mxu0 0.0
        %794 = vmatprep.subr.mxu0 0.0
        %795 = vmatpush2.msra.mxu0 0.0
        %796 = vmatprep.subr.mxu0 0.0
        %797 = vmatpush2.msra.mxu0 0.0
        %798 = vmatprep.mubr.f32.mxu0 0.0
        %799 = vmatmul.mubr.f32.gmra.mxu0 %v732
        %v800 = vpop.f32.mrf.mxu0
        %v801 = vadd.f32 %v728, %v800
        %v802 = vpop.f32.mrf.mxu0
        %803 = vdwg.mxu0
        %v804 = vmul.f32 %v801, 0.35355338
        %806 = vrot.lane.b32.xlu0 %v801, 96
        %v807 = vpop.permute.xlu0 %806
        %vm808 = vcmask 64512
        %v810 = vsel %vm808, %v804, 0
        %v812 = vsel %vm808, %v807, 0
        %814 = vmatprep.subr.mxu0 0.0
        %815 = vmatpush1.xpose.msra.mxu0 0.0
        %816 = vmatprep.subr.mxu0 0.0
        %817 = vmatpush1.xpose.msra.mxu0 0.0
        %818 = vmatprep.subr.mxu0 0.0
        %819 = vmatpush1.xpose.msra.mxu0 0.0
        %820 = vmatprep.subr.mxu0 0.0
        %821 = vmatpush1.xpose.msra.mxu0 0.0
        %822 = vmatprep.subr.mxu0 0.0
        %823 = vmatpush1.xpose.msra.mxu0 0.0
        %824 = vmatprep.subr.mxu0 0.0
        %825 = vmatpush1.xpose.msra.mxu0 0.0
        %826 = vmatprep.subr.mxu0 0.0
        %827 = vmatpush1.xpose.msra.mxu0 0.0
        %828 = vmatprep.subr.mxu0 0.0
        %829 = vmatpush1.xpose.msra.mxu0 0.0
        %830 = vmatprep.subr.mxu0 0.0
        %831 = vmatpush1.xpose.msra.mxu0 0.0
        %832 = vmatprep.subr.mxu0 0.0
        %833 = vmatpush1.xpose.msra.mxu0 0.0
        %834 = vmatprep.subr.mxu0 0.0
        %835 = vmatpush1.xpose.msra.mxu0 0.0
        %836 = vmatprep.subr.mxu0 0.0
        %837 = vmatpush1.xpose.msra.mxu0 0.0
        %838 = vmatprep.subr.mxu0 0.0
        %839 = vmatpush1.xpose.msra.mxu0 0.0
        %840 = vmatprep.subr.mxu0 0.0
        %841 = vmatpush1.xpose.msra.mxu0 0.0
        %842 = vmatprep.subr.mxu0 0.0
        %843 = vmatpush1.xpose.msra.mxu0 0.0
        %844 = vmatprep.subr.mxu0 0.0
        %845 = vmatpush1.xpose.msra.mxu0 %v812
        %846 = vmatprep.subr.mxu0 0.0
        %847 = vmatpush2.xpose.msra.mxu0 0.0
        %848 = vmatprep.subr.mxu0 0.0
        %849 = vmatpush2.xpose.msra.mxu0 0.0
        %850 = vmatprep.subr.mxu0 0.0
        %851 = vmatpush2.xpose.msra.mxu0 0.0
        %852 = vmatprep.subr.mxu0 0.0
        %853 = vmatpush2.xpose.msra.mxu0 0.0
        %854 = vmatprep.subr.mxu0 0.0
        %855 = vmatpush2.xpose.msra.mxu0 0.0
        %856 = vmatprep.subr.mxu0 0.0
        %857 = vmatpush2.xpose.msra.mxu0 0.0
        %858 = vmatprep.subr.mxu0 0.0
        %859 = vmatpush2.xpose.msra.mxu0 0.0
        %860 = vmatprep.subr.mxu0 0.0
        %861 = vmatpush2.xpose.msra.mxu0 0.0
        %862 = vmatprep.subr.mxu0 0.0
        %863 = vmatpush2.xpose.msra.mxu0 0.0
        %864 = vmatprep.subr.mxu0 0.0
        %865 = vmatpush2.xpose.msra.mxu0 0.0
        %866 = vmatprep.subr.mxu0 0.0
        %867 = vmatpush2.xpose.msra.mxu0 0.0
        %868 = vmatprep.subr.mxu0 0.0
        %869 = vmatpush2.xpose.msra.mxu0 0.0
        %870 = vmatprep.subr.mxu0 0.0
        %871 = vmatpush2.xpose.msra.mxu0 0.0
        %872 = vmatprep.subr.mxu0 0.0
        %873 = vmatpush2.xpose.msra.mxu0 0.0
        %874 = vmatprep.subr.mxu0 0.0
        %875 = vmatpush2.xpose.msra.mxu0 0.0
        %876 = vmatprep.subr.mxu0 0.0
        %877 = vmatpush2.xpose.msra.mxu0 0.0
        %878 = vmatprep.mubr.f32.mxu0 0.0
        %879 = vmatmul.mubr.f32.gmra.mxu0 %v810
        %v880 = vpop.f32.mrf.mxu0
        %v881 = vadd.f32 0.0, %v880
        %v882 = vpop.f32.mrf.mxu0
        %883 = vdwg.mxu0
        %v884 = vsel %vm808, %v881, -inf
        %885 = vmax.xlane.f32.xlu0 %v884
        %v886 = vpop.xlane.xlu0 %885
        %v887 = vsub.f32 %v881, %v886
        %v888 = vmul.f32 %v887, 1.442695
        %v889 = vpow.pop %v888
        %v890 = vsel %vm808, %v889, 0.0
        %891 = vadd.xlane.f32.xlu0 %v890
        %v892 = vpop.xlane.xlu0 %891
        %893 = vrot.lane.b32.xlu0 %v801, 64
        %v894 = vpop.permute.xlu0 %893
        %v897 = vsel %vm808, %v889, 0
        %899 = vmatprep.subr.mxu0 0.0
        %900 = vmatpush1.msra.mxu0 0.0
        %901 = vmatprep.subr.mxu0 0.0
        %902 = vmatpush1.msra.mxu0 0.0
        %903 = vmatprep.subr.mxu0 0.0
        %904 = vmatpush1.msra.mxu0 0.0
        %905 = vmatprep.subr.mxu0 0.0
        %906 = vmatpush1.msra.mxu0 0.0
        %907 = vmatprep.subr.mxu0 0.0
        %908 = vmatpush1.msra.mxu0 0.0
        %909 = vmatprep.subr.mxu0 0.0
        %910 = vmatpush1.msra.mxu0 0.0
        %911 = vmatprep.subr.mxu0 0.0
        %912 = vmatpush1.msra.mxu0 0.0
        %913 = vmatprep.subr.mxu0 0.0
        %914 = vmatpush1.msra.mxu0 0.0
        %915 = vmatprep.subr.mxu0 0.0
        %916 = vmatpush1.msra.mxu0 0.0
        %917 = vmatprep.subr.mxu0 0.0
        %918 = vmatpush1.msra.mxu0 0.0
        %919 = vmatprep.subr.mxu0 0.0
        %920 = vmatpush1.msra.mxu0 0.0
        %921 = vmatprep.subr.mxu0 0.0
        %922 = vmatpush1.msra.mxu0 0.0
        %923 = vmatprep.subr.mxu0 0.0
        %924 = vmatpush1.msra.mxu0 0.0
        %925 = vmatprep.subr.mxu0 0.0
        %926 = vmatpush1.msra.mxu0 0.0
        %927 = vmatprep.subr.mxu0 0.0
        %928 = vmatpush1.msra.mxu0 0.0
        %929 = vmatprep.subr.mxu0 0.0
        %930 = vmatpush1.msra.mxu0 %v894
        %931 = vmatprep.subr.mxu0 0.0
        %932 = vmatpush2.msra.mxu0 0.0
        %933 = vmatprep.subr.mxu0 0.0
        %934 = vmatpush2.msra.mxu0 0.0
        %935 = vmatprep.subr.mxu0 0.0
        %936 = vmatpush2.msra.mxu0 0.0
        %937 = vmatprep.subr.mxu0 0.0
        %938 = vmatpush2.msra.mxu0 0.0
        %939 = vmatprep.subr.mxu0 0.0
        %940 = vmatpush2.msra.mxu0 0.0
        %941 = vmatprep.subr.mxu0 0.0
        %942 = vmatpush2.msra.mxu0 0.0
        %943 = vmatprep.subr.mxu0 0.0
        %944 = vmatpush2.msra.mxu0 0.0
        %945 = vmatprep.subr.mxu0 0.0
        %946 = vmatpush2.msra.mxu0 0.0
        %947 = vmatprep.subr.mxu0 0.0
        %948 = vmatpush2.msra.mxu0 0.0
        %949 = vmatprep.subr.mxu0 0.0
        %950 = vmatpush2.msra.mxu0 0.0
        %951 = vmatprep.subr.mxu0 0.0
        %952 = vmatpush2.msra.mxu0 0.0
        %953 = vmatprep.subr.mxu0 0.0
        %954 = vmatpush2.msra.mxu0 0.0
        %955 = vmatprep.subr.mxu0 0.0
        %956 = vmatpush2.msra.mxu0 0.0
        %957 = vmatprep.subr.mxu0 0.0
        %958 = vmatpush2.msra.mxu0 0.0
        %959 = vmatprep.subr.mxu0 0.0
        %960 = vmatpush2.msra.mxu0 0.0
        %961 = vmatprep.subr.mxu0 0.0
        %962 = vmatpush2.msra.mxu0 0.0
        %963 = vmatprep.mubr.f32.mxu0 0.0
        %964 = vmatmul.mubr.f32.gmra.mxu0 %v897
        %v965 = vpop.f32.mrf.mxu0
        %v966 = vadd.f32 0.0, %v965
        %v967 = vpop.f32.mrf.mxu0
        %968 = vdwg.mxu0
        %v969 = vrcp.pop %v892
        %v970 = vmul.f32 %v966, %v969
        %971 = vst.msk [vmem:[#allocation2] sm:$0xff] %vm808, %v970
        %972 = vrot.lane.b32.xlu0 %v804, 120
        %v973 = vpop.permute.xlu0 %972
        %974 = vrot.lane.b32.xlu0 %v801, 88
        %v975 = vpop.permute.xlu0 %974
        %v976 = vsel %vm808, %v973, 0
        %v978 = vsel %vm808, %v975, 0
        %980 = vmatprep.subr.mxu0 0.0
        %981 = vmatpush1.xpose.msra.mxu0 0.0
        %982 = vmatprep.subr.mxu0 0.0
        %983 = vmatpush1.xpose.msra.mxu0 0.0
        %984 = vmatprep.subr.mxu0 0.0
        %985 = vmatpush1.xpose.msra.mxu0 0.0
        %986 = vmatprep.subr.mxu0 0.0
        %987 = vmatpush1.xpose.msra.mxu0 0.0
        %988 = vmatprep.subr.mxu0 0.0
        %989 = vmatpush1.xpose.msra.mxu0 0.0
        %990 = vmatprep.subr.mxu0 0.0
        %991 = vmatpush1.xpose.msra.mxu0 0.0
        %992 = vmatprep.subr.mxu0 0.0
        %993 = vmatpush1.xpose.msra.mxu0 0.0
        %994 = vmatprep.subr.mxu0 0.0
        %995 = vmatpush1.xpose.msra.mxu0 0.0
        %996 = vmatprep.subr.mxu0 0.0
        %997 = vmatpush1.xpose.msra.mxu0 0.0
        %998 = vmatprep.subr.mxu0 0.0
        %999 = vmatpush1.xpose.msra.mxu0 0.0
        %1000 = vmatprep.subr.mxu0 0.0
        %1001 = vmatpush1.xpose.msra.mxu0 0.0
        %1002 = vmatprep.subr.mxu0 0.0
        %1003 = vmatpush1.xpose.msra.mxu0 0.0
        %1004 = vmatprep.subr.mxu0 0.0
        %1005 = vmatpush1.xpose.msra.mxu0 0.0
        %1006 = vmatprep.subr.mxu0 0.0
        %1007 = vmatpush1.xpose.msra.mxu0 0.0
        %1008 = vmatprep.subr.mxu0 0.0
        %1009 = vmatpush1.xpose.msra.mxu0 0.0
        %1010 = vmatprep.subr.mxu0 0.0
        %1011 = vmatpush1.xpose.msra.mxu0 %v978
        %1012 = vmatprep.subr.mxu0 0.0
        %1013 = vmatpush2.xpose.msra.mxu0 0.0
        %1014 = vmatprep.subr.mxu0 0.0
        %1015 = vmatpush2.xpose.msra.mxu0 0.0
        %1016 = vmatprep.subr.mxu0 0.0
        %1017 = vmatpush2.xpose.msra.mxu0 0.0
        %1018 = vmatprep.subr.mxu0 0.0
        %1019 = vmatpush2.xpose.msra.mxu0 0.0
        %1020 = vmatprep.subr.mxu0 0.0
        %1021 = vmatpush2.xpose.msra.mxu0 0.0
        %1022 = vmatprep.subr.mxu0 0.0
        %1023 = vmatpush2.xpose.msra.mxu0 0.0
        %1024 = vmatprep.subr.mxu0 0.0
        %1025 = vmatpush2.xpose.msra.mxu0 0.0
        %1026 = vmatprep.subr.mxu0 0.0
        %1027 = vmatpush2.xpose.msra.mxu0 0.0
        %1028 = vmatprep.subr.mxu0 0.0
        %1029 = vmatpush2.xpose.msra.mxu0 0.0
        %1030 = vmatprep.subr.mxu0 0.0
        %1031 = vmatpush2.xpose.msra.mxu0 0.0
        %1032 = vmatprep.subr.mxu0 0.0
        %1033 = vmatpush2.xpose.msra.mxu0 0.0
        %1034 = vmatprep.subr.mxu0 0.0
        %1035 = vmatpush2.xpose.msra.mxu0 0.0
        %1036 = vmatprep.subr.mxu0 0.0
        %1037 = vmatpush2.xpose.msra.mxu0 0.0
        %1038 = vmatprep.subr.mxu0 0.0
        %1039 = vmatpush2.xpose.msra.mxu0 0.0
        %1040 = vmatprep.subr.mxu0 0.0
        %1041 = vmatpush2.xpose.msra.mxu0 0.0
        %1042 = vmatprep.subr.mxu0 0.0
        %1043 = vmatpush2.xpose.msra.mxu0 0.0
        %1044 = vmatprep.mubr.f32.mxu0 0.0
        %1045 = vmatmul.mubr.f32.gmra.mxu0 %v976
        %v1046 = vpop.f32.mrf.mxu0
        %v1047 = vadd.f32 0.0, %v1046
        %v1048 = vpop.f32.mrf.mxu0
        %1049 = vdwg.mxu0
        %v1050 = vsel %vm808, %v1047, -inf
        %1051 = vmax.xlane.f32.xlu0 %v1050
        %v1052 = vpop.xlane.xlu0 %1051
        %v1053 = vsub.f32 %v1047, %v1052
        %v1054 = vmul.f32 %v1053, 1.442695
        %v1055 = vpow.pop %v1054
        %v1056 = vsel %vm808, %v1055, 0.0
        %1057 = vadd.xlane.f32.xlu0 %v1056
        %v1058 = vpop.xlane.xlu0 %1057
        %1059 = vrot.lane.b32.xlu0 %v801, 56
        %v1060 = vpop.permute.xlu0 %1059
        %v1063 = vsel %vm808, %v1055, 0
        %1065 = vmatprep.subr.mxu0 0.0
        %1066 = vmatpush1.msra.mxu0 0.0
        %1067 = vmatprep.subr.mxu0 0.0
        %1068 = vmatpush1.msra.mxu0 0.0
        %1069 = vmatprep.subr.mxu0 0.0
        %1070 = vmatpush1.msra.mxu0 0.0
        %1071 = vmatprep.subr.mxu0 0.0
        %1072 = vmatpush1.msra.mxu0 0.0
        %1073 = vmatprep.subr.mxu0 0.0
        %1074 = vmatpush1.msra.mxu0 0.0
        %1075 = vmatprep.subr.mxu0 0.0
        %1076 = vmatpush1.msra.mxu0 0.0
        %1077 = vmatprep.subr.mxu0 0.0
        %1078 = vmatpush1.msra.mxu0 0.0
        %1079 = vmatprep.subr.mxu0 0.0
        %1080 = vmatpush1.msra.mxu0 0.0
        %1081 = vmatprep.subr.mxu0 0.0
        %1082 = vmatpush1.msra.mxu0 0.0
        %1083 = vmatprep.subr.mxu0 0.0
        %1084 = vmatpush1.msra.mxu0 0.0
        %1085 = vmatprep.subr.mxu0 0.0
        %1086 = vmatpush1.msra.mxu0 0.0
        %1087 = vmatprep.subr.mxu0 0.0
        %1088 = vmatpush1.msra.mxu0 0.0
        %1089 = vmatprep.subr.mxu0 0.0
        %1090 = vmatpush1.msra.mxu0 0.0
        %1091 = vmatprep.subr.mxu0 0.0
        %1092 = vmatpush1.msra.mxu0 0.0
        %1093 = vmatprep.subr.mxu0 0.0
        %1094 = vmatpush1.msra.mxu0 0.0
        %1095 = vmatprep.subr.mxu0 0.0
        %1096 = vmatpush1.msra.mxu0 %v1060
        %1097 = vmatprep.subr.mxu0 0.0
        %1098 = vmatpush2.msra.mxu0 0.0
        %1099 = vmatprep.subr.mxu0 0.0
        %1100 = vmatpush2.msra.mxu0 0.0
        %1101 = vmatprep.subr.mxu0 0.0
        %1102 = vmatpush2.msra.mxu0 0.0
        %1103 = vmatprep.subr.mxu0 0.0
        %1104 = vmatpush2.msra.mxu0 0.0
        %1105 = vmatprep.subr.mxu0 0.0
        %1106 = vmatpush2.msra.mxu0 0.0
        %1107 = vmatprep.subr.mxu0 0.0
        %1108 = vmatpush2.msra.mxu0 0.0
        %1109 = vmatprep.subr.mxu0 0.0
        %1110 = vmatpush2.msra.mxu0 0.0
        %1111 = vmatprep.subr.mxu0 0.0
        %1112 = vmatpush2.msra.mxu0 0.0
        %1113 = vmatprep.subr.mxu0 0.0
        %1114 = vmatpush2.msra.mxu0 0.0
        %1115 = vmatprep.subr.mxu0 0.0
        %1116 = vmatpush2.msra.mxu0 0.0
        %1117 = vmatprep.subr.mxu0 0.0
        %1118 = vmatpush2.msra.mxu0 0.0
        %1119 = vmatprep.subr.mxu0 0.0
        %1120 = vmatpush2.msra.mxu0 0.0
        %1121 = vmatprep.subr.mxu0 0.0
        %1122 = vmatpush2.msra.mxu0 0.0
        %1123 = vmatprep.subr.mxu0 0.0
        %1124 = vmatpush2.msra.mxu0 0.0
        %1125 = vmatprep.subr.mxu0 0.0
        %1126 = vmatpush2.msra.mxu0 0.0
        %1127 = vmatprep.subr.mxu0 0.0
        %1128 = vmatpush2.msra.mxu0 0.0
        %1129 = vmatprep.mubr.f32.mxu0 0.0
        %1130 = vmatmul.mubr.f32.gmra.mxu0 %v1063
        %v1131 = vpop.f32.mrf.mxu0
        %v1132 = vadd.f32 0.0, %v1131
        %v1133 = vpop.f32.mrf.mxu0
        %1134 = vdwg.mxu0
        %v1135 = vrcp.pop %v1058
        %v1136 = vmul.f32 %v1132, %v1135
        %1138 = vrot.lane.b32.xlu0 %v1136, 8
        %v1139 = vpop.permute.xlu0 %1138
        %vm1141 = vcmask 130112
        %1142 = vst.msk [vmem:[#allocation2] sm:$0xff] %vm1141, %v1139
        %1143 = vrot.lane.b32.xlu0 %v804, 112
        %v1144 = vpop.permute.xlu0 %1143
        %1145 = vrot.lane.b32.xlu0 %v801, 80
        %v1146 = vpop.permute.xlu0 %1145
        %v1147 = vsel %vm808, %v1144, 0
        %v1149 = vsel %vm808, %v1146, 0
        %1151 = vmatprep.subr.mxu0 0.0
        %1152 = vmatpush1.xpose.msra.mxu0 0.0
        %1153 = vmatprep.subr.mxu0 0.0
        %1154 = vmatpush1.xpose.msra.mxu0 0.0
        %1155 = vmatprep.subr.mxu0 0.0
        %1156 = vmatpush1.xpose.msra.mxu0 0.0
        %1157 = vmatprep.subr.mxu0 0.0
        %1158 = vmatpush1.xpose.msra.mxu0 0.0
        %1159 = vmatprep.subr.mxu0 0.0
        %1160 = vmatpush1.xpose.msra.mxu0 0.0
        %1161 = vmatprep.subr.mxu0 0.0
        %1162 = vmatpush1.xpose.msra.mxu0 0.0
        %1163 = vmatprep.subr.mxu0 0.0
        %1164 = vmatpush1.xpose.msra.mxu0 0.0
        %1165 = vmatprep.subr.mxu0 0.0
        %1166 = vmatpush1.xpose.msra.mxu0 0.0
        %1167 = vmatprep.subr.mxu0 0.0
        %1168 = vmatpush1.xpose.msra.mxu0 0.0
        %1169 = vmatprep.subr.mxu0 0.0
        %1170 = vmatpush1.xpose.msra.mxu0 0.0
        %1171 = vmatprep.subr.mxu0 0.0
        %1172 = vmatpush1.xpose.msra.mxu0 0.0
        %1173 = vmatprep.subr.mxu0 0.0
        %1174 = vmatpush1.xpose.msra.mxu0 0.0
        %1175 = vmatprep.subr.mxu0 0.0
        %1176 = vmatpush1.xpose.msra.mxu0 0.0
        %1177 = vmatprep.subr.mxu0 0.0
        %1178 = vmatpush1.xpose.msra.mxu0 0.0
        %1179 = vmatprep.subr.mxu0 0.0
        %1180 = vmatpush1.xpose.msra.mxu0 0.0
        %1181 = vmatprep.subr.mxu0 0.0
        %1182 = vmatpush1.xpose.msra.mxu0 %v1149
        %1183 = vmatprep.subr.mxu0 0.0
        %1184 = vmatpush2.xpose.msra.mxu0 0.0
        %1185 = vmatprep.subr.mxu0 0.0
        %1186 = vmatpush2.xpose.msra.mxu0 0.0
        %1187 = vmatprep.subr.mxu0 0.0
        %1188 = vmatpush2.xpose.msra.mxu0 0.0
        %1189 = vmatprep.subr.mxu0 0.0
        %1190 = vmatpush2.xpose.msra.mxu0 0.0
        %1191 = vmatprep.subr.mxu0 0.0
        %1192 = vmatpush2.xpose.msra.mxu0 0.0
        %1193 = vmatprep.subr.mxu0 0.0
        %1194 = vmatpush2.xpose.msra.mxu0 0.0
        %1195 = vmatprep.subr.mxu0 0.0
        %1196 = vmatpush2.xpose.msra.mxu0 0.0
        %1197 = vmatprep.subr.mxu0 0.0
        %1198 = vmatpush2.xpose.msra.mxu0 0.0
        %1199 = vmatprep.subr.mxu0 0.0
        %1200 = vmatpush2.xpose.msra.mxu0 0.0
        %1201 = vmatprep.subr.mxu0 0.0
        %1202 = vmatpush2.xpose.msra.mxu0 0.0
        %1203 = vmatprep.subr.mxu0 0.0
        %1204 = vmatpush2.xpose.msra.mxu0 0.0
        %1205 = vmatprep.subr.mxu0 0.0
        %1206 = vmatpush2.xpose.msra.mxu0 0.0
        %1207 = vmatprep.subr.mxu0 0.0
        %1208 = vmatpush2.xpose.msra.mxu0 0.0
        %1209 = vmatprep.subr.mxu0 0.0
        %1210 = vmatpush2.xpose.msra.mxu0 0.0
        %1211 = vmatprep.subr.mxu0 0.0
        %1212 = vmatpush2.xpose.msra.mxu0 0.0
        %1213 = vmatprep.subr.mxu0 0.0
        %1214 = vmatpush2.xpose.msra.mxu0 0.0
        %1215 = vmatprep.mubr.f32.mxu0 0.0
        %1216 = vmatmul.mubr.f32.gmra.mxu0 %v1147
        %v1217 = vpop.f32.mrf.mxu0
        %v1218 = vadd.f32 0.0, %v1217
        %v1219 = vpop.f32.mrf.mxu0
        %1220 = vdwg.mxu0
        %v1221 = vsel %vm808, %v1218, -inf
        %1222 = vmax.xlane.f32.xlu0 %v1221
        %v1223 = vpop.xlane.xlu0 %1222
        %v1224 = vsub.f32 %v1218, %v1223
        %v1225 = vmul.f32 %v1224, 1.442695
        %v1226 = vpow.pop %v1225
        %v1227 = vsel %vm808, %v1226, 0.0
        %1228 = vadd.xlane.f32.xlu0 %v1227
        %v1229 = vpop.xlane.xlu0 %1228
        %1230 = vrot.lane.b32.xlu0 %v801, 48
        %v1231 = vpop.permute.xlu0 %1230
        %v1234 = vsel %vm808, %v1226, 0
        %1236 = vmatprep.subr.mxu0 0.0
        %1237 = vmatpush1.msra.mxu0 0.0
        %1238 = vmatprep.subr.mxu0 0.0
        %1239 = vmatpush1.msra.mxu0 0.0
        %1240 = vmatprep.subr.mxu0 0.0
        %1241 = vmatpush1.msra.mxu0 0.0
        %1242 = vmatprep.subr.mxu0 0.0
        %1243 = vmatpush1.msra.mxu0 0.0
        %1244 = vmatprep.subr.mxu0 0.0
        %1245 = vmatpush1.msra.mxu0 0.0
        %1246 = vmatprep.subr.mxu0 0.0
        %1247 = vmatpush1.msra.mxu0 0.0
        %1248 = vmatprep.subr.mxu0 0.0
        %1249 = vmatpush1.msra.mxu0 0.0
        %1250 = vmatprep.subr.mxu0 0.0
        %1251 = vmatpush1.msra.mxu0 0.0
        %1252 = vmatprep.subr.mxu0 0.0
        %1253 = vmatpush1.msra.mxu0 0.0
        %1254 = vmatprep.subr.mxu0 0.0
        %1255 = vmatpush1.msra.mxu0 0.0
        %1256 = vmatprep.subr.mxu0 0.0
        %1257 = vmatpush1.msra.mxu0 0.0
        %1258 = vmatprep.subr.mxu0 0.0
        %1259 = vmatpush1.msra.mxu0 0.0
        %1260 = vmatprep.subr.mxu0 0.0
        %1261 = vmatpush1.msra.mxu0 0.0
        %1262 = vmatprep.subr.mxu0 0.0
        %1263 = vmatpush1.msra.mxu0 0.0
        %1264 = vmatprep.subr.mxu0 0.0
        %1265 = vmatpush1.msra.mxu0 0.0
        %1266 = vmatprep.subr.mxu0 0.0
        %1267 = vmatpush1.msra.mxu0 %v1231
        %1268 = vmatprep.subr.mxu0 0.0
        %1269 = vmatpush2.msra.mxu0 0.0
        %1270 = vmatprep.subr.mxu0 0.0
        %1271 = vmatpush2.msra.mxu0 0.0
        %1272 = vmatprep.subr.mxu0 0.0
        %1273 = vmatpush2.msra.mxu0 0.0
        %1274 = vmatprep.subr.mxu0 0.0
        %1275 = vmatpush2.msra.mxu0 0.0
        %1276 = vmatprep.subr.mxu0 0.0
        %1277 = vmatpush2.msra.mxu0 0.0
        %1278 = vmatprep.subr.mxu0 0.0
        %1279 = vmatpush2.msra.mxu0 0.0
        %1280 = vmatprep.subr.mxu0 0.0
        %1281 = vmatpush2.msra.mxu0 0.0
        %1282 = vmatprep.subr.mxu0 0.0
        %1283 = vmatpush2.msra.mxu0 0.0
        %1284 = vmatprep.subr.mxu0 0.0
        %1285 = vmatpush2.msra.mxu0 0.0
        %1286 = vmatprep.subr.mxu0 0.0
        %1287 = vmatpush2.msra.mxu0 0.0
        %1288 = vmatprep.subr.mxu0 0.0
        %1289 = vmatpush2.msra.mxu0 0.0
        %1290 = vmatprep.subr.mxu0 0.0
        %1291 = vmatpush2.msra.mxu0 0.0
        %1292 = vmatprep.subr.mxu0 0.0
        %1293 = vmatpush2.msra.mxu0 0.0
        %1294 = vmatprep.subr.mxu0 0.0
        %1295 = vmatpush2.msra.mxu0 0.0
        %1296 = vmatprep.subr.mxu0 0.0
        %1297 = vmatpush2.msra.mxu0 0.0
        %1298 = vmatprep.subr.mxu0 0.0
        %1299 = vmatpush2.msra.mxu0 0.0
        %1300 = vmatprep.mubr.f32.mxu0 0.0
        %1301 = vmatmul.mubr.f32.gmra.mxu0 %v1234
        %v1302 = vpop.f32.mrf.mxu0
        %v1303 = vadd.f32 0.0, %v1302
        %v1304 = vpop.f32.mrf.mxu0
        %1305 = vdwg.mxu0
        %v1306 = vrcp.pop %v1229
        %v1307 = vmul.f32 %v1303, %v1306
        %1309 = vrot.lane.b32.xlu0 %v1307, 16
        %v1310 = vpop.permute.xlu0 %1309
        %vm1312 = vcmask 195712
        %1313 = vst.msk [vmem:[#allocation2] sm:$0xff] %vm1312, %v1310
        %1314 = vrot.lane.b32.xlu0 %v804, 104
        %v1315 = vpop.permute.xlu0 %1314
        %1316 = vrot.lane.b32.xlu0 %v801, 72
        %v1317 = vpop.permute.xlu0 %1316
        %v1318 = vsel %vm808, %v1315, 0
        %v1320 = vsel %vm808, %v1317, 0
        %1322 = vmatprep.subr.mxu0 0.0
        %1323 = vmatpush1.xpose.msra.mxu0 0.0
        %1324 = vmatprep.subr.mxu0 0.0
        %1325 = vmatpush1.xpose.msra.mxu0 0.0
        %1326 = vmatprep.subr.mxu0 0.0
        %1327 = vmatpush1.xpose.msra.mxu0 0.0
        %1328 = vmatprep.subr.mxu0 0.0
        %1329 = vmatpush1.xpose.msra.mxu0 0.0
        %1330 = vmatprep.subr.mxu0 0.0
        %1331 = vmatpush1.xpose.msra.mxu0 0.0
        %1332 = vmatprep.subr.mxu0 0.0
        %1333 = vmatpush1.xpose.msra.mxu0 0.0
        %1334 = vmatprep.subr.mxu0 0.0
        %1335 = vmatpush1.xpose.msra.mxu0 0.0
        %1336 = vmatprep.subr.mxu0 0.0
        %1337 = vmatpush1.xpose.msra.mxu0 0.0
        %1338 = vmatprep.subr.mxu0 0.0
        %1339 = vmatpush1.xpose.msra.mxu0 0.0
        %1340 = vmatprep.subr.mxu0 0.0
        %1341 = vmatpush1.xpose.msra.mxu0 0.0
        %1342 = vmatprep.subr.mxu0 0.0
        %1343 = vmatpush1.xpose.msra.mxu0 0.0
        %1344 = vmatprep.subr.mxu0 0.0
        %1345 = vmatpush1.xpose.msra.mxu0 0.0
        %1346 = vmatprep.subr.mxu0 0.0
        %1347 = vmatpush1.xpose.msra.mxu0 0.0
        %1348 = vmatprep.subr.mxu0 0.0
        %1349 = vmatpush1.xpose.msra.mxu0 0.0
        %1350 = vmatprep.subr.mxu0 0.0
        %1351 = vmatpush1.xpose.msra.mxu0 0.0
        %1352 = vmatprep.subr.mxu0 0.0
        %1353 = vmatpush1.xpose.msra.mxu0 %v1320
        %1354 = vmatprep.subr.mxu0 0.0
        %1355 = vmatpush2.xpose.msra.mxu0 0.0
        %1356 = vmatprep.subr.mxu0 0.0
        %1357 = vmatpush2.xpose.msra.mxu0 0.0
        %1358 = vmatprep.subr.mxu0 0.0
        %1359 = vmatpush2.xpose.msra.mxu0 0.0
        %1360 = vmatprep.subr.mxu0 0.0
        %1361 = vmatpush2.xpose.msra.mxu0 0.0
        %1362 = vmatprep.subr.mxu0 0.0
        %1363 = vmatpush2.xpose.msra.mxu0 0.0
        %1364 = vmatprep.subr.mxu0 0.0
        %1365 = vmatpush2.xpose.msra.mxu0 0.0
        %1366 = vmatprep.subr.mxu0 0.0
        %1367 = vmatpush2.xpose.msra.mxu0 0.0
        %1368 = vmatprep.subr.mxu0 0.0
        %1369 = vmatpush2.xpose.msra.mxu0 0.0
        %1370 = vmatprep.subr.mxu0 0.0
        %1371 = vmatpush2.xpose.msra.mxu0 0.0
        %1372 = vmatprep.subr.mxu0 0.0
        %1373 = vmatpush2.xpose.msra.mxu0 0.0
        %1374 = vmatprep.subr.mxu0 0.0
        %1375 = vmatpush2.xpose.msra.mxu0 0.0
        %1376 = vmatprep.subr.mxu0 0.0
        %1377 = vmatpush2.xpose.msra.mxu0 0.0
        %1378 = vmatprep.subr.mxu0 0.0
        %1379 = vmatpush2.xpose.msra.mxu0 0.0
        %1380 = vmatprep.subr.mxu0 0.0
        %1381 = vmatpush2.xpose.msra.mxu0 0.0
        %1382 = vmatprep.subr.mxu0 0.0
        %1383 = vmatpush2.xpose.msra.mxu0 0.0
        %1384 = vmatprep.subr.mxu0 0.0
        %1385 = vmatpush2.xpose.msra.mxu0 0.0
        %1386 = vmatprep.mubr.f32.mxu0 0.0
        %1387 = vmatmul.mubr.f32.gmra.mxu0 %v1318
        %v1388 = vpop.f32.mrf.mxu0
        %v1389 = vadd.f32 0.0, %v1388
        %v1390 = vpop.f32.mrf.mxu0
        %1391 = vdwg.mxu0
        %v1392 = vsel %vm808, %v1389, -inf
        %1393 = vmax.xlane.f32.xlu0 %v1392
        %v1394 = vpop.xlane.xlu0 %1393
        %v1395 = vsub.f32 %v1389, %v1394
        %v1396 = vmul.f32 %v1395, 1.442695
        %v1397 = vpow.pop %v1396
        %v1398 = vsel %vm808, %v1397, 0.0
        %1399 = vadd.xlane.f32.xlu0 %v1398
        %v1400 = vpop.xlane.xlu0 %1399
        %1401 = vrot.lane.b32.xlu0 %v801, 40
        %v1402 = vpop.permute.xlu0 %1401
        %v1405 = vsel %vm808, %v1397, 0
        %1407 = vmatprep.subr.mxu0 0.0
        %1408 = vmatpush1.msra.mxu0 0.0
        %1409 = vmatprep.subr.mxu0 0.0
        %1410 = vmatpush1.msra.mxu0 0.0
        %1411 = vmatprep.subr.mxu0 0.0
        %1412 = vmatpush1.msra.mxu0 0.0
        %1413 = vmatprep.subr.mxu0 0.0
        %1414 = vmatpush1.msra.mxu0 0.0
        %1415 = vmatprep.subr.mxu0 0.0
        %1416 = vmatpush1.msra.mxu0 0.0
        %1417 = vmatprep.subr.mxu0 0.0
        %1418 = vmatpush1.msra.mxu0 0.0
        %1419 = vmatprep.subr.mxu0 0.0
        %1420 = vmatpush1.msra.mxu0 0.0
        %1421 = vmatprep.subr.mxu0 0.0
        %1422 = vmatpush1.msra.mxu0 0.0
        %1423 = vmatprep.subr.mxu0 0.0
        %1424 = vmatpush1.msra.mxu0 0.0
        %1425 = vmatprep.subr.mxu0 0.0
        %1426 = vmatpush1.msra.mxu0 0.0
        %1427 = vmatprep.subr.mxu0 0.0
        %1428 = vmatpush1.msra.mxu0 0.0
        %1429 = vmatprep.subr.mxu0 0.0
        %1430 = vmatpush1.msra.mxu0 0.0
        %1431 = vmatprep.subr.mxu0 0.0
        %1432 = vmatpush1.msra.mxu0 0.0
        %1433 = vmatprep.subr.mxu0 0.0
        %1434 = vmatpush1.msra.mxu0 0.0
        %1435 = vmatprep.subr.mxu0 0.0
        %1436 = vmatpush1.msra.mxu0 0.0
        %1437 = vmatprep.subr.mxu0 0.0
        %1438 = vmatpush1.msra.mxu0 %v1402
        %1439 = vmatprep.subr.mxu0 0.0
        %1440 = vmatpush2.msra.mxu0 0.0
        %1441 = vmatprep.subr.mxu0 0.0
        %1442 = vmatpush2.msra.mxu0 0.0
        %1443 = vmatprep.subr.mxu0 0.0
        %1444 = vmatpush2.msra.mxu0 0.0
        %1445 = vmatprep.subr.mxu0 0.0
        %1446 = vmatpush2.msra.mxu0 0.0
        %1447 = vmatprep.subr.mxu0 0.0
        %1448 = vmatpush2.msra.mxu0 0.0
        %1449 = vmatprep.subr.mxu0 0.0
        %1450 = vmatpush2.msra.mxu0 0.0
        %1451 = vmatprep.subr.mxu0 0.0
        %1452 = vmatpush2.msra.mxu0 0.0
        %1453 = vmatprep.subr.mxu0 0.0
        %1454 = vmatpush2.msra.mxu0 0.0
        %1455 = vmatprep.subr.mxu0 0.0
        %1456 = vmatpush2.msra.mxu0 0.0
        %1457 = vmatprep.subr.mxu0 0.0
        %1458 = vmatpush2.msra.mxu0 0.0
        %1459 = vmatprep.subr.mxu0 0.0
        %1460 = vmatpush2.msra.mxu0 0.0
        %1461 = vmatprep.subr.mxu0 0.0
        %1462 = vmatpush2.msra.mxu0 0.0
        %1463 = vmatprep.subr.mxu0 0.0
        %1464 = vmatpush2.msra.mxu0 0.0
        %1465 = vmatprep.subr.mxu0 0.0
        %1466 = vmatpush2.msra.mxu0 0.0
        %1467 = vmatprep.subr.mxu0 0.0
        %1468 = vmatpush2.msra.mxu0 0.0
        %1469 = vmatprep.subr.mxu0 0.0
        %1470 = vmatpush2.msra.mxu0 0.0
        %1471 = vmatprep.mubr.f32.mxu0 0.0
        %1472 = vmatmul.mubr.f32.gmra.mxu0 %v1405
        %v1473 = vpop.f32.mrf.mxu0
        %v1474 = vadd.f32 0.0, %v1473
        %v1475 = vpop.f32.mrf.mxu0
        %1476 = vdwg.mxu0
        %v1477 = vrcp.pop %v1400
        %v1478 = vmul.f32 %v1474, %v1477
        %1480 = vrot.lane.b32.xlu0 %v1478, 24
        %v1481 = vpop.permute.xlu0 %1480
        %vm1483 = vcmask 261312
        %1484 = vst.msk [vmem:[#allocation2] sm:$0xff] %vm1483, %v1481
        %v1485 = vld [vmem:[#allocation2] sm:$0xff]
        %v1486 = vld [vmem:[%s625] sm:$0xff]
        %v1487 = vld [vmem:[%s625 + $0x8] sm:$0xff]
        %v1488 = vld [vmem:[%s625 + $0x10] sm:$0xff]
        %v1489 = vld [vmem:[%s625 + $0x18] sm:$0xff]
        %v1490 = vld [vmem:[%s628] sm:$0x1]
        %v1492 = vlaneseq
        %v1493 = vshrl.u32 %v1492, 7
        %v1494 = vsub.s32 0, %v1493
        %v1495 = vrot.slane %v1490, %v1494
        %v1498 = vsel %vm730, %v1485, 0
        %1500 = vmatprep.subr.mxu0 0.0
        %1501 = vmatpush1.msra.mxu0 0.0
        %1502 = vmatprep.subr.mxu0 0.0
        %1503 = vmatpush1.msra.mxu0 0.0
        %1504 = vmatprep.subr.mxu0 0.0
        %1505 = vmatpush1.msra.mxu0 0.0
        %1506 = vmatprep.subr.mxu0 0.0
        %1507 = vmatpush1.msra.mxu0 0.0
        %1508 = vmatprep.subr.mxu0 0.0
        %1509 = vmatpush1.msra.mxu0 0.0
        %1510 = vmatprep.subr.mxu0 0.0
        %1511 = vmatpush1.msra.mxu0 0.0
        %1512 = vmatprep.subr.mxu0 0.0
        %1513 = vmatpush1.msra.mxu0 0.0
        %1514 = vmatprep.subr.mxu0 0.0
        %1515 = vmatpush1.msra.mxu0 0.0
        %1516 = vmatprep.subr.mxu0 0.0
        %1517 = vmatpush1.msra.mxu0 0.0
        %1518 = vmatprep.subr.mxu0 0.0
        %1519 = vmatpush1.msra.mxu0 0.0
        %1520 = vmatprep.subr.mxu0 0.0
        %1521 = vmatpush1.msra.mxu0 0.0
        %1522 = vmatprep.subr.mxu0 0.0
        %1523 = vmatpush1.msra.mxu0 0.0
        %1524 = vmatprep.subr.mxu0 0.0
        %1525 = vmatpush1.msra.mxu0 %v1489
        %1526 = vmatprep.subr.mxu0 0.0
        %1527 = vmatpush1.msra.mxu0 %v1488
        %1528 = vmatprep.subr.mxu0 0.0
        %1529 = vmatpush1.msra.mxu0 %v1487
        %1530 = vmatprep.subr.mxu0 0.0
        %1531 = vmatpush1.msra.mxu0 %v1486
        %1532 = vmatprep.subr.mxu0 0.0
        %1533 = vmatpush2.msra.mxu0 0.0
        %1534 = vmatprep.subr.mxu0 0.0
        %1535 = vmatpush2.msra.mxu0 0.0
        %1536 = vmatprep.subr.mxu0 0.0
        %1537 = vmatpush2.msra.mxu0 0.0
        %1538 = vmatprep.subr.mxu0 0.0
        %1539 = vmatpush2.msra.mxu0 0.0
        %1540 = vmatprep.subr.mxu0 0.0
        %1541 = vmatpush2.msra.mxu0 0.0
        %1542 = vmatprep.subr.mxu0 0.0
        %1543 = vmatpush2.msra.mxu0 0.0
        %1544 = vmatprep.subr.mxu0 0.0
        %1545 = vmatpush2.msra.mxu0 0.0
        %1546 = vmatprep.subr.mxu0 0.0
        %1547 = vmatpush2.msra.mxu0 0.0
        %1548 = vmatprep.subr.mxu0 0.0
        %1549 = vmatpush2.msra.mxu0 0.0
        %1550 = vmatprep.subr.mxu0 0.0
        %1551 = vmatpush2.msra.mxu0 0.0
        %1552 = vmatprep.subr.mxu0 0.0
        %1553 = vmatpush2.msra.mxu0 0.0
        %1554 = vmatprep.subr.mxu0 0.0
        %1555 = vmatpush2.msra.mxu0 0.0
        %1556 = vmatprep.subr.mxu0 0.0
        %1557 = vmatpush2.msra.mxu0 0.0
        %1558 = vmatprep.subr.mxu0 0.0
        %1559 = vmatpush2.msra.mxu0 0.0
        %1560 = vmatprep.subr.mxu0 0.0
        %1561 = vmatpush2.msra.mxu0 0.0
        %1562 = vmatprep.subr.mxu0 0.0
        %1563 = vmatpush2.msra.mxu0 0.0
        %1564 = vmatprep.mubr.f32.mxu0 0.0
        %1565 = vmatmul.mubr.f32.gmra.mxu0 %v1498
        %v1566 = vpop.f32.mrf.mxu0
        %v1567 = vadd.f32 %v1495, %v1566
        %v1568 = vpop.f32.mrf.mxu0
        %1569 = vdwg.mxu0
        %v1570 = vadd.f32 %v718, %v1567
        %v1571 = vsel %vm730, %v1570, 0.0
        %1572 = vadd.xlane.f32.xlu0 %v1571
        %v1573 = vpop.xlane.xlu0 %1572
        %v1574 = vrcp.pop 32.0
        %v1575 = vmul.f32 %v1573, %v1574
        %v1576 = vsub.f32 %v1570, %v1575
        %v1577 = vmul.f32 %v1576, %v1576
        %v1578 = vsel %vm730, %v1577, 0.0
        %1579 = vadd.xlane.f32.xlu0 %v1578
        %v1580 = vpop.xlane.xlu0 %1579
        %v1581 = vmul.f32 %v1580, %v1574
        %v1582 = vadd.f32 %v1581, 1e-05
        %v1583 = vrsqrt.pop %v1582
        %v1584 = vmul.f32 %v1576, %v1583
        %v1585 = vld [vmem:[%s631] sm:$0x1]
        %v1587 = vlaneseq
        %v1588 = vshrl.u32 %v1587, 7
        %v1589 = vsub.s32 0, %v1588
        %v1590 = vrot.slane %v1585, %v1589
        %v1592 = vmul.f32 %v1584, %v1590
        %v1593 = vld [vmem:[%s634] sm:$0x1]
        %v1595 = vlaneseq
        %v1596 = vshrl.u32 %v1595, 7
        %v1597 = vsub.s32 0, %v1596
        %v1598 = vrot.slane %v1593, %v1597
        %v1600 = vadd.f32 %v1592, %v1598
        %v1601 = vld [vmem:[%s639] sm:$0xff]
        %v1602 = vld [vmem:[%s639 + $0x8] sm:$0xff]
        %v1603 = vld [vmem:[%s639 + $0x10] sm:$0xff]
        %v1604 = vld [vmem:[%s639 + $0x18] sm:$0xff]
        %v1605 = vld [vmem:[%s642] sm:$0x1]
        %v1607 = vlaneseq
        %v1608 = vshrl.u32 %v1607, 7
        %v1609 = vsub.s32 0, %v1608
        %v1610 = vrot.slane %v1605, %v1609
        %v1613 = vsel %vm730, %v1600, 0
        %1615 = vmatprep.subr.mxu0 0.0
        %1616 = vmatpush1.msra.mxu0 0.0
        %1617 = vmatprep.subr.mxu0 0.0
        %1618 = vmatpush1.msra.mxu0 0.0
        %1619 = vmatprep.subr.mxu0 0.0
        %1620 = vmatpush1.msra.mxu0 0.0
        %1621 = vmatprep.subr.mxu0 0.0
        %1622 = vmatpush1.msra.mxu0 0.0
        %1623 = vmatprep.subr.mxu0 0.0
        %1624 = vmatpush1.msra.mxu0 0.0
        %1625 = vmatprep.subr.mxu0 0.0
        %1626 = vmatpush1.msra.mxu0 0.0
        %1627 = vmatprep.subr.mxu0 0.0
        %1628 = vmatpush1.msra.mxu0 0.0
        %1629 = vmatprep.subr.mxu0 0.0
        %1630 = vmatpush1.msra.mxu0 0.0
        %1631 = vmatprep.subr.mxu0 0.0
        %1632 = vmatpush1.msra.mxu0 0.0
        %1633 = vmatprep.subr.mxu0 0.0
        %1634 = vmatpush1.msra.mxu0 0.0
        %1635 = vmatprep.subr.mxu0 0.0
        %1636 = vmatpush1.msra.mxu0 0.0
        %1637 = vmatprep.subr.mxu0 0.0
        %1638 = vmatpush1.msra.mxu0 0.0
        %1639 = vmatprep.subr.mxu0 0.0
        %1640 = vmatpush1.msra.mxu0 %v1604
        %1641 = vmatprep.subr.mxu0 0.0
        %1642 = vmatpush1.msra.mxu0 %v1603
        %1643 = vmatprep.subr.mxu0 0.0
        %1644 = vmatpush1.msra.mxu0 %v1602
        %1645 = vmatprep.subr.mxu0 0.0
        %1646 = vmatpush1.msra.mxu0 %v1601
        %1647 = vmatprep.subr.mxu0 0.0
        %1648 = vmatpush2.msra.mxu0 0.0
        %1649 = vmatprep.subr.mxu0 0.0
        %1650 = vmatpush2.msra.mxu0 0.0
        %1651 = vmatprep.subr.mxu0 0.0
        %1652 = vmatpush2.msra.mxu0 0.0
        %1653 = vmatprep.subr.mxu0 0.0
        %1654 = vmatpush2.msra.mxu0 0.0
        %1655 = vmatprep.subr.mxu0 0.0
        %1656 = vmatpush2.msra.mxu0 0.0
        %1657 = vmatprep.subr.mxu0 0.0
        %1658 = vmatpush2.msra.mxu0 0.0
        %1659 = vmatprep.subr.mxu0 0.0
        %1660 = vmatpush2.msra.mxu0 0.0
        %1661 = vmatprep.subr.mxu0 0.0
        %1662 = vmatpush2.msra.mxu0 0.0
        %1663 = vmatprep.subr.mxu0 0.0
        %1664 = vmatpush2.msra.mxu0 0.0
        %1665 = vmatprep.subr.mxu0 0.0
        %1666 = vmatpush2.msra.mxu0 0.0
        %1667 = vmatprep.subr.mxu0 0.0
        %1668 = vmatpush2.msra.mxu0 0.0
        %1669 = vmatprep.subr.mxu0 0.0
        %1670 = vmatpush2.msra.mxu0 0.0
        %1671 = vmatprep.subr.mxu0 0.0
        %1672 = vmatpush2.msra.mxu0 0.0
        %1673 = vmatprep.subr.mxu0 0.0
        %1674 = vmatpush2.msra.mxu0 0.0
        %1675 = vmatprep.subr.mxu0 0.0
        %1676 = vmatpush2.msra.mxu0 0.0
        %1677 = vmatprep.subr.mxu0 0.0
        %1678 = vmatpush2.msra.mxu0 0.0
        %1679 = vmatprep.mubr.f32.mxu0 0.0
        %1680 = vmatmul.mubr.f32.gmra.mxu0 %v1613
        %v1681 = vpop.f32.mrf.mxu0
        %v1682 = vadd.f32 %v1610, %v1681
        %v1683 = vpop.f32.mrf.mxu0
        %1684 = vdwg.mxu0
        %v1685 = vmax.f32 %v1682, 0.0
        %v1686 = vld [vmem:[%s647] sm:$0xff]
        %v1687 = vld [vmem:[%s647 + $0x8] sm:$0xff]
        %v1688 = vld [vmem:[%s647 + $0x10] sm:$0xff]
        %v1689 = vld [vmem:[%s647 + $0x18] sm:$0xff]
        %v1690 = vld [vmem:[%s647 + $0x20] sm:$0xff]
        %v1691 = vld [vmem:[%s647 + $0x28] sm:$0xff]
        %v1692 = vld [vmem:[%s647 + $0x30] sm:$0xff]
        %v1693 = vld [vmem:[%s647 + $0x38] sm:$0xff]
        %v1694 = vld [vmem:[%s650] sm:$0x1]
        %v1696 = vlaneseq
        %v1697 = vshrl.u32 %v1696, 7
        %v1698 = vsub.s32 0, %v1697
        %v1699 = vrot.slane %v1694, %v1698
        %vm1701 = vcmask 523264
        %v1703 = vsel %vm1701, %v1685, 0
        %1705 = vmatprep.subr.mxu0 0.0
        %1706 = vmatpush1.msra.mxu0 0.0
        %1707 = vmatprep.subr.mxu0 0.0
        %1708 = vmatpush1.msra.mxu0 0.0
        %1709 = vmatprep.subr.mxu0 0.0
        %1710 = vmatpush1.msra.mxu0 0.0
        %1711 = vmatprep.subr.mxu0 0.0
        %1712 = vmatpush1.msra.mxu0 0.0
        %1713 = vmatprep.subr.mxu0 0.0
        %1714 = vmatpush1.msra.mxu0 0.0
        %1715 = vmatprep.subr.mxu0 0.0
        %1716 = vmatpush1.msra.mxu0 0.0
        %1717 = vmatprep.subr.mxu0 0.0
        %1718 = vmatpush1.msra.mxu0 0.0
        %1719 = vmatprep.subr.mxu0 0.0
        %1720 = vmatpush1.msra.mxu0 0.0
        %1721 = vmatprep.subr.mxu0 0.0
        %1722 = vmatpush1.msra.mxu0 %v1693
        %1723 = vmatprep.subr.mxu0 0.0
        %1724 = vmatpush1.msra.mxu0 %v1692
        %1725 = vmatprep.subr.mxu0 0.0
        %1726 = vmatpush1.msra.mxu0 %v1691
        %1727 = vmatprep.subr.mxu0 0.0
        %1728 = vmatpush1.msra.mxu0 %v1690
        %1729 = vmatprep.subr.mxu0 0.0
        %1730 = vmatpush1.msra.mxu0 %v1689
        %1731 = vmatprep.subr.mxu0 0.0
        %1732 = vmatpush1.msra.mxu0 %v1688
        %1733 = vmatprep.subr.mxu0 0.0
        %1734 = vmatpush1.msra.mxu0 %v1687
        %1735 = vmatprep.subr.mxu0 0.0
        %1736 = vmatpush1.msra.mxu0 %v1686
        %1737 = vmatprep.subr.mxu0 0.0
        %1738 = vmatpush2.msra.mxu0 0.0
        %1739 = vmatprep.subr.mxu0 0.0
        %1740 = vmatpush2.msra.mxu0 0.0
        %1741 = vmatprep.subr.mxu0 0.0
        %1742 = vmatpush2.msra.mxu0 0.0
        %1743 = vmatprep.subr.mxu0 0.0
        %1744 = vmatpush2.msra.mxu0 0.0
        %1745 = vmatprep.subr.mxu0 0.0
        %1746 = vmatpush2.msra.mxu0 0.0
        %1747 = vmatprep.subr.mxu0 0.0
        %1748 = vmatpush2.msra.mxu0 0.0
        %1749 = vmatprep.subr.mxu0 0.0
        %1750 = vmatpush2.msra.mxu0 0.0
        %1751 = vmatprep.subr.mxu0 0.0
        %1752 = vmatpush2.msra.mxu0 0.0
        %1753 = vmatprep.subr.mxu0 0.0
        %1754 = vmatpush2.msra.mxu0 0.0
        %1755 = vmatprep.subr.mxu0 0.0
        %1756 = vmatpush2.msra.mxu0 0.0
        %1757 = vmatprep.subr.mxu0 0.0
        %1758 = vmatpush2.msra.mxu0 0.0
        %1759 = vmatprep.subr.mxu0 0.0
        %1760 = vmatpush2.msra.mxu0 0.0
        %1761 = vmatprep.subr.mxu0 0.0
        %1762 = vmatpush2.msra.mxu0 0.0
        %1763 = vmatprep.subr.mxu0 0.0
        %1764 = vmatpush2.msra.mxu0 0.0
        %1765 = vmatprep.subr.mxu0 0.0
        %1766 = vmatpush2.msra.mxu0 0.0
        %1767 = vmatprep.subr.mxu0 0.0
        %1768 = vmatpush2.msra.mxu0 0.0
        %1769 = vmatprep.mubr.f32.mxu0 0.0
        %1770 = vmatmul.mubr.f32.gmra.mxu0 %v1703
        %v1771 = vpop.f32.mrf.mxu0
        %v1772 = vadd.f32 %v1699, %v1771
        %v1773 = vpop.f32.mrf.mxu0
        %1774 = vdwg.mxu0
        %v1775 = vadd.f32 %v1600, %v1772
        %v1776 = vsel %vm730, %v1775, 0.0
        %1777 = vadd.xlane.f32.xlu0 %v1776
        %v1778 = vpop.xlane.xlu0 %1777
        %v1779 = vmul.f32 %v1778, %v1574
        %v1780 = vsub.f32 %v1775, %v1779
        %v1781 = vmul.f32 %v1780, %v1780
        %v1782 = vsel %vm730, %v1781, 0.0
        %1783 = vadd.xlane.f32.xlu0 %v1782
        %v1784 = vpop.xlane.xlu0 %1783
        %v1785 = vmul.f32 %v1784, %v1574
        %v1786 = vadd.f32 %v1785, 1e-05
        %v1787 = vrsqrt.pop %v1786
        %v1788 = vmul.f32 %v1780, %v1787
        %v1789 = vld [vmem:[%s653] sm:$0x1]
        %v1791 = vlaneseq
        %v1792 = vshrl.u32 %v1791, 7
        %v1793 = vsub.s32 0, %v1792
        %v1794 = vrot.slane %v1789, %v1793
        %v1796 = vmul.f32 %v1788, %v1794
        %v1797 = vld [vmem:[%s656] sm:$0x1]
        %v1799 = vlaneseq
        %v1800 = vshrl.u32 %v1799, 7
        %v1801 = vsub.s32 0, %v1800
        %v1802 = vrot.slane %v1797, %v1801
        %v1804 = vadd.f32 %v1796, %v1802
        %1805 = vst.msk [vmem:[%s612] sm:$0xff] %vm730, %v1804
        %s1806 = sand.u32 %s409, 1
        %s1807 = scalar_lea.sflag [#allocation6], %s1806
        %s1808 = sand.u32 %s409, 1
        %s1809 = smul.addr %s1808, 8
        %s1810 = scalar_lea.vmem [#allocation5], %s1809
        // Predicated region
        $region81: #{tpu_custom_call.1} parent=75 // pred_check
          %p1811 = pneg %p419
        $region82: #{tpu_custom_call.1} parent=75 // pred_check_branch
          %1813 = sbr.rel (%p1811) target = $region84
        $region83: #{tpu_custom_call.1} parent=75 // pred_region
          %s1815 = ssub.s32 128, 128
          %1816 = vsyncadd %s1807, %s1815
          %s1817 = smul.addr %s39, 128
          %s1818 = scalar_lea.hbm %s15, %s1817
          %s1820 = sshll.u32 %s1810, 4
          %s1821 = int_to_ptr.vmem [resolvable:$true] %s1820
          %1823 = dma.vmem_to_hbm [thread:$0]  %s1821, 128, %s1818, %s1807
        $region84: #{tpu_custom_call.1} parent=75 // pred_fallthru
          _
      $region76: #{tpu_custom_call.1} parent=5 // pred_fallthru
        _
      %p1824 = scmp.le.s32.totalorder 2, %s30
      // Predicated region
      $region85: #{tpu_custom_call.1} parent=5 // pred_check
        %p1825 = pneg %p1824
      $region86: #{tpu_custom_call.1} parent=5 // pred_check_branch
        %1827 = sbr.rel (%p1825) target = $region88
      $region87: #{tpu_custom_call.1} parent=5 // pred_region
        %s1828 = ssub.s32 %s30, 2
        // Predicated region
        $region89: #{tpu_custom_call.1} parent=87 // pred_check
          %p1829 = pneg %p425
        $region90: #{tpu_custom_call.1} parent=87 // pred_check_branch
          %1831 = sbr.rel (%p1829) target = $region92
        $region91: #{tpu_custom_call.1} parent=87 // pred_region
          %s1832 = sand.u32 %s410, 1
          %s1833 = scalar_lea.sflag [#allocation6], %s1832
          %s1834 = sand.u32 %s410, 1
          %s1835 = smul.addr %s1834, 8
          %s1836 = scalar_lea.vmem [#allocation5], %s1835
          %1837 = dma.done %s1833, 128
        $region92: #{tpu_custom_call.1} parent=87 // pred_fallthru
          _
      $region88: #{tpu_custom_call.1} parent=5 // pred_fallthru
        _
    $region6: #{tpu_custom_call.1} parent=1 // loop_footer
      %s34 = sadd.s32 1, %s30
    $region7: #{tpu_custom_call.1} parent=1 // loop_footer_branch
      %29 = sbr.rel target = $region3
    $region8: #{tpu_custom_call.1} parent=1 // loop_exit
      _
    %1838 = vsyncpa [#allocation6], 1
    %s1839 = scalar_lea.sflag [#allocation6], 1
    %1840 = vsyncpa %s1839, 1

</llo_original>
